<compile_context>
chip_gen: v6e
topology: v6e:2x2x1
jax: 0.10.0
libtpu: 0.0.40
codegen_flags: <defaults>
</compile_context>

<pallas_src>
import numpy as np
import jax
import jax.numpy as jnp
from jax import lax
from jax.experimental import pallas as pl
from jax.experimental.pallas import tpu as pltpu

LN_EPS = 1e-12  # BERT LayerNorm epsilon


def _round_up(x, m):
    return (x + m - 1) // m * m


# ----------------------------------------------------------------------------
# Fused kernel: DMA row-gather + LayerNorm + word-piece pooling matmul
# ----------------------------------------------------------------------------
def bert_embed_merge_kernel(ids_ref, word_hbm, seg_ref, pos_ref,
                            gamma_ref, beta_ref, out_ref, gbuf, sem):
    """One grid step == one block of Bt sentences.

    ids_ref  : SMEM (B_pad, S) int32  scalar-prefetched WordPiece ids (whole batch)
    word_hbm : HBM  (V, H)  f32       word-embedding table (never VMEM resident)
    seg_ref  : VMEM (Bt, 1, S) int32  per-token word index (-1 = CLS/SEP/pad -> drop)
    pos_ref  : VMEM (S, H)  f32       position + token-type-0 table (folded in wrapper)
    gamma/beta : VMEM (1, H) f32      LayerNorm affine
    out_ref  : VMEM (Bt, W_pad, H)    merged per-word embeddings (zero padded)
    gbuf     : VMEM (Bt*S, H) f32     gathered word-embedding rows
    sem      : DMA sems (Bt,)         ONE shared semaphore per sentence
    """
    bt, w_pad, h = out_ref.shape
    s = seg_ref.shape[-1]
    vmax = word_hbm.shape[0] - 1
    b0 = pl.program_id(0) * bt

    # ---- 1) issue ALL row-gather DMAs for the whole sentence block up front --
    # Every row of sentence j signals the SAME sem[j]; one slab-sized wait per
    # sentence (step 2) then collects all S rows at once — no per-row waits.
    # NOTE: S, Bt are small & static here; switch the row loop to pl.loop once
    # S grows past ~32 (real BERT S=512) to keep the instruction stream small.
    for j in range(bt):
        for i in range(s):
            row = jnp.minimum(jnp.maximum(ids_ref[b0 + j, i], 0), vmax)  # OOB-safe
            pltpu.make_async_copy(
                word_hbm.at[pl.ds(row, 1)],
                gbuf.at[pl.ds(j * s + i, 1)],
                sem.at[j]).start()

    wid = lax.broadcasted_iota(jnp.int32, (w_pad, s), 0)
    inv_h = 1.0 / h

    # ---- 2) per-sentence: aggregated wait -> embed + LayerNorm -> pooling ----
    # While sentence j is normalized/pooled, gathers of j+1..Bt-1 are still in
    # flight, so only the first sentence's gather per block is exposed.
    for j in range(bt):
        # Single wait whose descriptor byte count == the S row copies of sentence j.
        pltpu.make_async_copy(
            word_hbm.at[pl.ds(0, s)], gbuf.at[pl.ds(j * s, s)], sem.at[j]).wait()

        # word + position + token-type(0) embeddings (token-type folded into pos)
        x = gbuf[j * s:(j + 1) * s, :] + pos_ref[...]          # (S, H)

        # single-pass LayerNorm (f32 statistics, variance clamped vs cancellation)
        mu = jnp.sum(x, axis=-1, keepdims=True) * inv_h
        ex2 = jnp.sum(x * x, axis=-1, keepdims=True) * inv_h
        var = jnp.maximum(ex2 - mu * mu, 0.0)
        y = (x - mu) * lax.rsqrt(var + LN_EPS)
        y = y * gamma_ref[...] + beta_ref[...]

        # word-piece merge as one pooling matmul on the MXU (bf16 operands,
        # f32 accumulate).  A[w, t] = 1 iff token t belongs to word w; tokens
        # with seg == -1 ([CLS]/[SEP]/pad) are never selected, which also
        # implements the [:, 1:, :] CLS drop of the reference module.
        sel = seg_ref[j] == wid                                 # (W_pad, S) bool
        a = sel.astype(jnp.bfloat16)                            # exact 0/1 in bf16
        cnt = jnp.sum(sel.astype(jnp.float32), axis=-1, keepdims=True)
        pooled = jnp.dot(a, y.astype(jnp.bfloat16),
                         preferred_element_type=jnp.float32)    # (W_pad, H)
        inv_cnt = pl.reciprocal(jnp.maximum(cnt, 1.0), approx=True)  # EUP slot
        out_ref[j] = pooled * inv_cnt                           # mean; pad rows = 0


def bert_embed_and_merge(ids, seg, word_tab, pos_tab, tok_tab, gamma, beta,
                         w_pad, bt=8):
    """ids: (B, S) int32, seg: (B, 1, S) int32 word-index map (-1 = drop)."""
    b, s = ids.shape
    _, h = word_tab.shape
    bt = max(1, min(bt, b))
    b_pad = _round_up(b, bt)
    if b_pad != b:                       # pad batch to a multiple of Bt
        ids = jnp.concatenate(
            [ids, jnp.zeros((b_pad - b, s), ids.dtype)], axis=0)
        seg = jnp.concatenate(
            [seg, jnp.full((b_pad - b, 1, s), -1, seg.dtype)], axis=0)

    # Fold the token-type-0 row into the position table once (the module never
    # passes token-type ids), dropping one VMEM input + one (S,H) add/sentence.
    pos_plus_tok = pos_tab + tok_tab[0:1, :]

    # VMEM budget note: gather buffer = Bt*S*H*4 B (+ blocks).  For real
    # BERT-large (S=512, H=1024) that is ~2 MB/sentence -> Bt≈8 fits v5e's
    # 16 MiB scoped default and leaves headroom on v7x's 64 MiB physical.
    grid_spec = pltpu.PrefetchScalarGridSpec(
        num_scalar_prefetch=1,                  # ids -> SMEM, drive DMA gather
        grid=(b_pad // bt,),
        in_specs=[
            pl.BlockSpec(memory_space=pl.ANY),                    # word table (HBM)
            pl.BlockSpec((bt, 1, s), lambda g, ids: (g, 0, 0)),   # seg map
            pl.BlockSpec((s, h), lambda g, ids: (0, 0)),          # pos(+tok) table
            pl.BlockSpec((1, h), lambda g, ids: (0, 0)),          # gamma
            pl.BlockSpec((1, h), lambda g, ids: (0, 0)),          # beta
        ],
        out_specs=pl.BlockSpec((bt, w_pad, h), lambda g, ids: (g, 0, 0)),
        scratch_shapes=[
            pltpu.VMEM((bt * s, h), jnp.float32),   # gathered word rows (block)
            pltpu.SemaphoreType.DMA((bt,)),         # one shared sem per sentence
        ],
    )
    out = pl.pallas_call(
        bert_embed_merge_kernel,
        out_shape=jax.ShapeDtypeStruct((b_pad, w_pad, h), jnp.float32),
        grid_spec=grid_spec,
        compiler_params=pltpu.CompilerParams(
            dimension_semantics=("parallel",)),     # sentence blocks shard cores
    )(ids, word_tab, seg, pos_plus_tok, gamma, beta)
    return out[:b]


# ----------------------------------------------------------------------------
# Pure numpy reference (same math) for a correctness check
# ----------------------------------------------------------------------------
def reference(ids, word_tab, pos_tab, tok_tab, gamma, beta, merge_windows,
              w_max):
    x = word_tab[ids] + pos_tab[None, :, :] + tok_tab[0]
    mu = x.mean(-1, keepdims=True)
    var = ((x - mu) ** 2).mean(-1, keepdims=True)
    y = (x - mu) / np.sqrt(var + LN_EPS) * gamma + beta
    emb = y[:, 1:, :]                                    # drop [CLS]
    b, _, h = emb.shape
    merged = np.zeros((b, w_max, h), np.float32)
    for i, wins in enumerate(merge_windows):
        k = 0
        for j, w in enumerate(wins):
            merged[i, j] = emb[i, k:k + w].mean(0)
            k += w
    return merged


if __name__ == "__main__":
    key = jax.random.PRNGKey(0)
    B = 3
    H = 128          # lane-dense stand-in for embedding_size (768 / 1024)
    V = 64           # synthetic WordPiece vocab

    # word-piece counts per word, per sentence (output of tokenize_sentence)
    merge_windows = [[2, 1, 3, 1], [1, 2, 2], [1, 1, 1, 2, 1]]
    sent_tok_lens = [sum(w) for w in merge_windows]        # [7, 5, 6]
    S_tok = 2 + max(sent_tok_lens)                         # [CLS]+toks+[SEP]=9
    S_pad = _round_up(S_tok, 8)                            # sublane-dense rows
    W_MAX = max(len(w) for w in merge_windows)             # 5 words max
    W_PAD = _round_up(W_MAX, 8)                            # sublane-dense output

    k_ids, k_w, k_p, k_t, k_g, k_b = jax.random.split(key, 6)

    # Deterministic "tokenized + padded" ids: [CLS]=1, tokens in [3,V), [SEP]=2,
    # pad=0.
    rand_tok = np.asarray(
        jax.random.randint(k_ids, (B, S_pad), 3, V, dtype=jnp.int32))
    ids_np = np.zeros((B, S_pad), np.int32)
    for i, L in enumerate(sent_tok_lens):
        ids_np[i, 0] = 1
        ids_np[i, 1:1 + L] = rand_tok[i, :L]
        ids_np[i, 1 + L] = 2
    # Host-side validation kept; the kernel additionally clamps ids so an OOB
    # id can never turn into an unchecked HBM DMA read.
    assert ids_np.min() >= 0 and ids_np.max() < V

    # Per-token word index (relative to the full [CLS]-included sequence);
    # -1 marks [CLS]/[SEP]/padding (dropped by the pooling matrix).
    seg_np = np.full((B, 1, S_pad), -1, np.int32)
    for i, wins in enumerate(merge_windows):
        t = 1                                              # skip [CLS]
        for j, w in enumerate(wins):
            seg_np[i, 0, t:t + w] = j
            t += w

    # Synthetic BERT embedding-layer parameters.
    word_tab = 0.05 * jax.random.normal(k_w, (V, H), jnp.float32)
    pos_tab = 0.05 * jax.random.normal(k_p, (S_pad, H), jnp.float32)
    tok_tab = 0.05 * jax.random.normal(k_t, (2, H), jnp.float32)
    gamma = 1.0 + 0.05 * jax.random.normal(k_g, (1, H), jnp.float32)
    beta = 0.05 * jax.random.normal(k_b, (1, H), jnp.float32)

    # Bt=2 sentences per grid step (exercises batch padding + a 2-step grid).
    out = bert_embed_and_merge(jnp.asarray(ids_np), jnp.asarray(seg_np),
                               word_tab, pos_tab, tok_tab, gamma, beta,
                               W_PAD, bt=2)
    out = np.asarray(jax.block_until_ready(out))
    merged = out[:, :W_MAX, :]          # module pads only to the longest sentence

    ref = reference(ids_np, np.asarray(word_tab), np.asarray(pos_tab),
                    np.asarray(tok_tab), np.asarray(gamma), np.asarray(beta),
                    merge_windows, W_MAX)
    # bf16 MXU operands + approx reciprocal -> ~1e-2 relative error budget;
    # structural mistakes would be O(1), so 2e-2 remains a strict check.
    np.testing.assert_allclose(merged, ref, rtol=2e-2, atol=2e-2)
    np.testing.assert_allclose(out[:, W_MAX:, :], 0.0, atol=1e-6)  # zero padding
    assert merged.shape == (B, W_MAX, H)
    print("KERNEL_OK")
</pallas_src>

<mosaic_0001>
module attributes {stable_mosaic.version = 11 : i64} {
  func.func @bert_embed_merge_kernel(%arg0: i32, %arg1: memref<4x16xi32, #tpu.memory_space<smem>>, %arg2: memref<64x128xf32, #tpu.memory_space<any>>, %arg3: memref<2x1x16xi32, #tpu.memory_space<vmem>>, %arg4: memref<16x128xf32, #tpu.memory_space<vmem>>, %arg5: memref<1x128xf32, #tpu.memory_space<vmem>>, %arg6: memref<1x128xf32, #tpu.memory_space<vmem>>, %arg7: memref<2x8x128xf32, #tpu.memory_space<vmem>>, %arg8: memref<32x128xf32, #tpu.memory_space<vmem>>, %arg9: memref<2x!tpu.dma_semaphore, #tpu.memory_space<semaphore_mem>>) attributes {dimension_semantics = [#tpu.dimension_semantics<parallel>], iteration_bounds = array<i64: 2>, scalar_prefetch = 1 : i64, scratch_operands = 2 : i64, tpu.core_type = #tpu.core_type<tc>, window_params = [{}, {transform_indices = @transform_1, window_bounds = array<i64: 2, 1, 16>}, {pipeline_mode = #tpu.pipeline_mode<synchronous>, transform_indices = @transform_2, window_bounds = array<i64: 16, 128>}, {pipeline_mode = #tpu.pipeline_mode<synchronous>, transform_indices = @transform_3, window_bounds = array<i64: 1, 128>}, {pipeline_mode = #tpu.pipeline_mode<synchronous>, transform_indices = @transform_4, window_bounds = array<i64: 1, 128>}, {transform_indices = @transform_5, window_bounds = array<i64: 2, 8, 128>}]} {
    %c2_i32 = arith.constant 2 : i32
    %0 = arith.muli %arg0, %c2_i32 : i32
    %c0_i32 = arith.constant 0 : i32
    %1 = arith.addi %0, %c0_i32 : i32
    %2 = arith.index_cast %1 : i32 to index
    %c0 = arith.constant 0 : index
    %3 = memref.load %arg1[%2, %c0] : memref<4x16xi32, #tpu.memory_space<smem>>
    %c0_i32_0 = arith.constant 0 : i32
    %4 = arith.maxsi %3, %c0_i32_0 : i32
    %c63_i32 = arith.constant 63 : i32
    %5 = arith.minsi %4, %c63_i32 : i32
    %c0_i32_1 = arith.constant 0 : i32
    %c0_i32_2 = arith.constant 0 : i32
    %6 = tpu.memref_slice %arg2[%5, %c0_i32_2] : memref<64x128xf32, #tpu.memory_space<any>> -> memref<1x128xf32, #tpu.memory_space<any>>
    %c0_i32_3 = arith.constant 0 : i32
    %c0_i32_4 = arith.constant 0 : i32
    %7 = tpu.memref_slice %arg8[%c0_i32_3, %c0_i32_4] : memref<32x128xf32, #tpu.memory_space<vmem>> -> memref<1x128xf32, #tpu.memory_space<vmem>>
    %8 = tpu.memref_slice %arg9[%c0_i32_1] : memref<2x!tpu.dma_semaphore, #tpu.memory_space<semaphore_mem>> -> memref<1x!tpu.dma_semaphore, #tpu.memory_space<semaphore_mem>>
    %9 = tpu.memref_squeeze %8 : memref<1x!tpu.dma_semaphore, #tpu.memory_space<semaphore_mem>> -> memref<!tpu.dma_semaphore, #tpu.memory_space<semaphore_mem>>
    tpu.enqueue_dma source(%6 : memref<1x128xf32, #tpu.memory_space<any>>) target(%7 : memref<1x128xf32, #tpu.memory_space<vmem>>) target_semaphore(%9 : memref<!tpu.dma_semaphore, #tpu.memory_space<semaphore_mem>>)
    %c0_i32_5 = arith.constant 0 : i32
    %10 = arith.addi %0, %c0_i32_5 : i32
    %11 = arith.index_cast %10 : i32 to index
    %c1 = arith.constant 1 : index
    %12 = memref.load %arg1[%11, %c1] : memref<4x16xi32, #tpu.memory_space<smem>>
    %c0_i32_6 = arith.constant 0 : i32
    %13 = arith.maxsi %12, %c0_i32_6 : i32
    %c63_i32_7 = arith.constant 63 : i32
    %14 = arith.minsi %13, %c63_i32_7 : i32
    %c0_i32_8 = arith.constant 0 : i32
    %c0_i32_9 = arith.constant 0 : i32
    %15 = tpu.memref_slice %arg2[%14, %c0_i32_9] : memref<64x128xf32, #tpu.memory_space<any>> -> memref<1x128xf32, #tpu.memory_space<any>>
    %c1_i32 = arith.constant 1 : i32
    %c0_i32_10 = arith.constant 0 : i32
    %16 = tpu.memref_slice %arg8[%c1_i32, %c0_i32_10] : memref<32x128xf32, #tpu.memory_space<vmem>> -> memref<1x128xf32, #tpu.memory_space<vmem>>
    %17 = tpu.memref_slice %arg9[%c0_i32_8] : memref<2x!tpu.dma_semaphore, #tpu.memory_space<semaphore_mem>> -> memref<1x!tpu.dma_semaphore, #tpu.memory_space<semaphore_mem>>
    %18 = tpu.memref_squeeze %17 : memref<1x!tpu.dma_semaphore, #tpu.memory_space<semaphore_mem>> -> memref<!tpu.dma_semaphore, #tpu.memory_space<semaphore_mem>>
    tpu.enqueue_dma source(%15 : memref<1x128xf32, #tpu.memory_space<any>>) target(%16 : memref<1x128xf32, #tpu.memory_space<vmem>>) target_semaphore(%18 : memref<!tpu.dma_semaphore, #tpu.memory_space<semaphore_mem>>)
    %c0_i32_11 = arith.constant 0 : i32
    %19 = arith.addi %0, %c0_i32_11 : i32
    %20 = arith.index_cast %19 : i32 to index
    %c2 = arith.constant 2 : index
    %21 = memref.load %arg1[%20, %c2] : memref<4x16xi32, #tpu.memory_space<smem>>
    %c0_i32_12 = arith.constant 0 : i32
    %22 = arith.maxsi %21, %c0_i32_12 : i32
    %c63_i32_13 = arith.constant 63 : i32
    %23 = arith.minsi %22, %c63_i32_13 : i32
    %c0_i32_14 = arith.constant 0 : i32
    %c0_i32_15 = arith.constant 0 : i32
    %24 = tpu.memref_slice %arg2[%23, %c0_i32_15] : memref<64x128xf32, #tpu.memory_space<any>> -> memref<1x128xf32, #tpu.memory_space<any>>
    %c2_i32_16 = arith.constant 2 : i32
    %c0_i32_17 = arith.constant 0 : i32
    %25 = tpu.memref_slice %arg8[%c2_i32_16, %c0_i32_17] : memref<32x128xf32, #tpu.memory_space<vmem>> -> memref<1x128xf32, #tpu.memory_space<vmem>>
    %26 = tpu.memref_slice %arg9[%c0_i32_14] : memref<2x!tpu.dma_semaphore, #tpu.memory_space<semaphore_mem>> -> memref<1x!tpu.dma_semaphore, #tpu.memory_space<semaphore_mem>>
    %27 = tpu.memref_squeeze %26 : memref<1x!tpu.dma_semaphore, #tpu.memory_space<semaphore_mem>> -> memref<!tpu.dma_semaphore, #tpu.memory_space<semaphore_mem>>
    tpu.enqueue_dma source(%24 : memref<1x128xf32, #tpu.memory_space<any>>) target(%25 : memref<1x128xf32, #tpu.memory_space<vmem>>) target_semaphore(%27 : memref<!tpu.dma_semaphore, #tpu.memory_space<semaphore_mem>>)
    %c0_i32_18 = arith.constant 0 : i32
    %28 = arith.addi %0, %c0_i32_18 : i32
    %29 = arith.index_cast %28 : i32 to index
    %c3 = arith.constant 3 : index
    %30 = memref.load %arg1[%29, %c3] : memref<4x16xi32, #tpu.memory_space<smem>>
    %c0_i32_19 = arith.constant 0 : i32
    %31 = arith.maxsi %30, %c0_i32_19 : i32
    %c63_i32_20 = arith.constant 63 : i32
    %32 = arith.minsi %31, %c63_i32_20 : i32
    %c0_i32_21 = arith.constant 0 : i32
    %c0_i32_22 = arith.constant 0 : i32
    %33 = tpu.memref_slice %arg2[%32, %c0_i32_22] : memref<64x128xf32, #tpu.memory_space<any>> -> memref<1x128xf32, #tpu.memory_space<any>>
    %c3_i32 = arith.constant 3 : i32
    %c0_i32_23 = arith.constant 0 : i32
    %34 = tpu.memref_slice %arg8[%c3_i32, %c0_i32_23] : memref<32x128xf32, #tpu.memory_space<vmem>> -> memref<1x128xf32, #tpu.memory_space<vmem>>
    %35 = tpu.memref_slice %arg9[%c0_i32_21] : memref<2x!tpu.dma_semaphore, #tpu.memory_space<semaphore_mem>> -> memref<1x!tpu.dma_semaphore, #tpu.memory_space<semaphore_mem>>
    %36 = tpu.memref_squeeze %35 : memref<1x!tpu.dma_semaphore, #tpu.memory_space<semaphore_mem>> -> memref<!tpu.dma_semaphore, #tpu.memory_space<semaphore_mem>>
    tpu.enqueue_dma source(%33 : memref<1x128xf32, #tpu.memory_space<any>>) target(%34 : memref<1x128xf32, #tpu.memory_space<vmem>>) target_semaphore(%36 : memref<!tpu.dma_semaphore, #tpu.memory_space<semaphore_mem>>)
    %c0_i32_24 = arith.constant 0 : i32
    %37 = arith.addi %0, %c0_i32_24 : i32
    %38 = arith.index_cast %37 : i32 to index
    %c4 = arith.constant 4 : index
    %39 = memref.load %arg1[%38, %c4] : memref<4x16xi32, #tpu.memory_space<smem>>
    %c0_i32_25 = arith.constant 0 : i32
    %40 = arith.maxsi %39, %c0_i32_25 : i32
    %c63_i32_26 = arith.constant 63 : i32
    %41 = arith.minsi %40, %c63_i32_26 : i32
    %c0_i32_27 = arith.constant 0 : i32
    %c0_i32_28 = arith.constant 0 : i32
    %42 = tpu.memref_slice %arg2[%41, %c0_i32_28] : memref<64x128xf32, #tpu.memory_space<any>> -> memref<1x128xf32, #tpu.memory_space<any>>
    %c4_i32 = arith.constant 4 : i32
    %c0_i32_29 = arith.constant 0 : i32
    %43 = tpu.memref_slice %arg8[%c4_i32, %c0_i32_29] : memref<32x128xf32, #tpu.memory_space<vmem>> -> memref<1x128xf32, #tpu.memory_space<vmem>>
    %44 = tpu.memref_slice %arg9[%c0_i32_27] : memref<2x!tpu.dma_semaphore, #tpu.memory_space<semaphore_mem>> -> memref<1x!tpu.dma_semaphore, #tpu.memory_space<semaphore_mem>>
    %45 = tpu.memref_squeeze %44 : memref<1x!tpu.dma_semaphore, #tpu.memory_space<semaphore_mem>> -> memref<!tpu.dma_semaphore, #tpu.memory_space<semaphore_mem>>
    tpu.enqueue_dma source(%42 : memref<1x128xf32, #tpu.memory_space<any>>) target(%43 : memref<1x128xf32, #tpu.memory_space<vmem>>) target_semaphore(%45 : memref<!tpu.dma_semaphore, #tpu.memory_space<semaphore_mem>>)
    %c0_i32_30 = arith.constant 0 : i32
    %46 = arith.addi %0, %c0_i32_30 : i32
    %47 = arith.index_cast %46 : i32 to index
    %c5 = arith.constant 5 : index
    %48 = memref.load %arg1[%47, %c5] : memref<4x16xi32, #tpu.memory_space<smem>>
    %c0_i32_31 = arith.constant 0 : i32
    %49 = arith.maxsi %48, %c0_i32_31 : i32
    %c63_i32_32 = arith.constant 63 : i32
    %50 = arith.minsi %49, %c63_i32_32 : i32
    %c0_i32_33 = arith.constant 0 : i32
    %c0_i32_34 = arith.constant 0 : i32
    %51 = tpu.memref_slice %arg2[%50, %c0_i32_34] : memref<64x128xf32, #tpu.memory_space<any>> -> memref<1x128xf32, #tpu.memory_space<any>>
    %c5_i32 = arith.constant 5 : i32
    %c0_i32_35 = arith.constant 0 : i32
    %52 = tpu.memref_slice %arg8[%c5_i32, %c0_i32_35] : memref<32x128xf32, #tpu.memory_space<vmem>> -> memref<1x128xf32, #tpu.memory_space<vmem>>
    %53 = tpu.memref_slice %arg9[%c0_i32_33] : memref<2x!tpu.dma_semaphore, #tpu.memory_space<semaphore_mem>> -> memref<1x!tpu.dma_semaphore, #tpu.memory_space<semaphore_mem>>
    %54 = tpu.memref_squeeze %53 : memref<1x!tpu.dma_semaphore, #tpu.memory_space<semaphore_mem>> -> memref<!tpu.dma_semaphore, #tpu.memory_space<semaphore_mem>>
    tpu.enqueue_dma source(%51 : memref<1x128xf32, #tpu.memory_space<any>>) target(%52 : memref<1x128xf32, #tpu.memory_space<vmem>>) target_semaphore(%54 : memref<!tpu.dma_semaphore, #tpu.memory_space<semaphore_mem>>)
    %c0_i32_36 = arith.constant 0 : i32
    %55 = arith.addi %0, %c0_i32_36 : i32
    %56 = arith.index_cast %55 : i32 to index
    %c6 = arith.constant 6 : index
    %57 = memref.load %arg1[%56, %c6] : memref<4x16xi32, #tpu.memory_space<smem>>
    %c0_i32_37 = arith.constant 0 : i32
    %58 = arith.maxsi %57, %c0_i32_37 : i32
    %c63_i32_38 = arith.constant 63 : i32
    %59 = arith.minsi %58, %c63_i32_38 : i32
    %c0_i32_39 = arith.constant 0 : i32
    %c0_i32_40 = arith.constant 0 : i32
    %60 = tpu.memref_slice %arg2[%59, %c0_i32_40] : memref<64x128xf32, #tpu.memory_space<any>> -> memref<1x128xf32, #tpu.memory_space<any>>
    %c6_i32 = arith.constant 6 : i32
    %c0_i32_41 = arith.constant 0 : i32
    %61 = tpu.memref_slice %arg8[%c6_i32, %c0_i32_41] : memref<32x128xf32, #tpu.memory_space<vmem>> -> memref<1x128xf32, #tpu.memory_space<vmem>>
    %62 = tpu.memref_slice %arg9[%c0_i32_39] : memref<2x!tpu.dma_semaphore, #tpu.memory_space<semaphore_mem>> -> memref<1x!tpu.dma_semaphore, #tpu.memory_space<semaphore_mem>>
    %63 = tpu.memref_squeeze %62 : memref<1x!tpu.dma_semaphore, #tpu.memory_space<semaphore_mem>> -> memref<!tpu.dma_semaphore, #tpu.memory_space<semaphore_mem>>
    tpu.enqueue_dma source(%60 : memref<1x128xf32, #tpu.memory_space<any>>) target(%61 : memref<1x128xf32, #tpu.memory_space<vmem>>) target_semaphore(%63 : memref<!tpu.dma_semaphore, #tpu.memory_space<semaphore_mem>>)
    %c0_i32_42 = arith.constant 0 : i32
    %64 = arith.addi %0, %c0_i32_42 : i32
    %65 = arith.index_cast %64 : i32 to index
    %c7 = arith.constant 7 : index
    %66 = memref.load %arg1[%65, %c7] : memref<4x16xi32, #tpu.memory_space<smem>>
    %c0_i32_43 = arith.constant 0 : i32
    %67 = arith.maxsi %66, %c0_i32_43 : i32
    %c63_i32_44 = arith.constant 63 : i32
    %68 = arith.minsi %67, %c63_i32_44 : i32
    %c0_i32_45 = arith.constant 0 : i32
    %c0_i32_46 = arith.constant 0 : i32
    %69 = tpu.memref_slice %arg2[%68, %c0_i32_46] : memref<64x128xf32, #tpu.memory_space<any>> -> memref<1x128xf32, #tpu.memory_space<any>>
    %c7_i32 = arith.constant 7 : i32
    %c0_i32_47 = arith.constant 0 : i32
    %70 = tpu.memref_slice %arg8[%c7_i32, %c0_i32_47] : memref<32x128xf32, #tpu.memory_space<vmem>> -> memref<1x128xf32, #tpu.memory_space<vmem>>
    %71 = tpu.memref_slice %arg9[%c0_i32_45] : memref<2x!tpu.dma_semaphore, #tpu.memory_space<semaphore_mem>> -> memref<1x!tpu.dma_semaphore, #tpu.memory_space<semaphore_mem>>
    %72 = tpu.memref_squeeze %71 : memref<1x!tpu.dma_semaphore, #tpu.memory_space<semaphore_mem>> -> memref<!tpu.dma_semaphore, #tpu.memory_space<semaphore_mem>>
    tpu.enqueue_dma source(%69 : memref<1x128xf32, #tpu.memory_space<any>>) target(%70 : memref<1x128xf32, #tpu.memory_space<vmem>>) target_semaphore(%72 : memref<!tpu.dma_semaphore, #tpu.memory_space<semaphore_mem>>)
    %c0_i32_48 = arith.constant 0 : i32
    %73 = arith.addi %0, %c0_i32_48 : i32
    %74 = arith.index_cast %73 : i32 to index
    %c8 = arith.constant 8 : index
    %75 = memref.load %arg1[%74, %c8] : memref<4x16xi32, #tpu.memory_space<smem>>
    %c0_i32_49 = arith.constant 0 : i32
    %76 = arith.maxsi %75, %c0_i32_49 : i32
    %c63_i32_50 = arith.constant 63 : i32
    %77 = arith.minsi %76, %c63_i32_50 : i32
    %c0_i32_51 = arith.constant 0 : i32
    %c0_i32_52 = arith.constant 0 : i32
    %78 = tpu.memref_slice %arg2[%77, %c0_i32_52] : memref<64x128xf32, #tpu.memory_space<any>> -> memref<1x128xf32, #tpu.memory_space<any>>
    %c8_i32 = arith.constant 8 : i32
    %c0_i32_53 = arith.constant 0 : i32
    %79 = tpu.memref_slice %arg8[%c8_i32, %c0_i32_53] : memref<32x128xf32, #tpu.memory_space<vmem>> -> memref<1x128xf32, #tpu.memory_space<vmem>>
    %80 = tpu.memref_slice %arg9[%c0_i32_51] : memref<2x!tpu.dma_semaphore, #tpu.memory_space<semaphore_mem>> -> memref<1x!tpu.dma_semaphore, #tpu.memory_space<semaphore_mem>>
    %81 = tpu.memref_squeeze %80 : memref<1x!tpu.dma_semaphore, #tpu.memory_space<semaphore_mem>> -> memref<!tpu.dma_semaphore, #tpu.memory_space<semaphore_mem>>
    tpu.enqueue_dma source(%78 : memref<1x128xf32, #tpu.memory_space<any>>) target(%79 : memref<1x128xf32, #tpu.memory_space<vmem>>) target_semaphore(%81 : memref<!tpu.dma_semaphore, #tpu.memory_space<semaphore_mem>>)
    %c0_i32_54 = arith.constant 0 : i32
    %82 = arith.addi %0, %c0_i32_54 : i32
    %83 = arith.index_cast %82 : i32 to index
    %c9 = arith.constant 9 : index
    %84 = memref.load %arg1[%83, %c9] : memref<4x16xi32, #tpu.memory_space<smem>>
    %c0_i32_55 = arith.constant 0 : i32
    %85 = arith.maxsi %84, %c0_i32_55 : i32
    %c63_i32_56 = arith.constant 63 : i32
    %86 = arith.minsi %85, %c63_i32_56 : i32
    %c0_i32_57 = arith.constant 0 : i32
    %c0_i32_58 = arith.constant 0 : i32
    %87 = tpu.memref_slice %arg2[%86, %c0_i32_58] : memref<64x128xf32, #tpu.memory_space<any>> -> memref<1x128xf32, #tpu.memory_space<any>>
    %c9_i32 = arith.constant 9 : i32
    %c0_i32_59 = arith.constant 0 : i32
    %88 = tpu.memref_slice %arg8[%c9_i32, %c0_i32_59] : memref<32x128xf32, #tpu.memory_space<vmem>> -> memref<1x128xf32, #tpu.memory_space<vmem>>
    %89 = tpu.memref_slice %arg9[%c0_i32_57] : memref<2x!tpu.dma_semaphore, #tpu.memory_space<semaphore_mem>> -> memref<1x!tpu.dma_semaphore, #tpu.memory_space<semaphore_mem>>
    %90 = tpu.memref_squeeze %89 : memref<1x!tpu.dma_semaphore, #tpu.memory_space<semaphore_mem>> -> memref<!tpu.dma_semaphore, #tpu.memory_space<semaphore_mem>>
    tpu.enqueue_dma source(%87 : memref<1x128xf32, #tpu.memory_space<any>>) target(%88 : memref<1x128xf32, #tpu.memory_space<vmem>>) target_semaphore(%90 : memref<!tpu.dma_semaphore, #tpu.memory_space<semaphore_mem>>)
    %c0_i32_60 = arith.constant 0 : i32
    %91 = arith.addi %0, %c0_i32_60 : i32
    %92 = arith.index_cast %91 : i32 to index
    %c10 = arith.constant 10 : index
    %93 = memref.load %arg1[%92, %c10] : memref<4x16xi32, #tpu.memory_space<smem>>
    %c0_i32_61 = arith.constant 0 : i32
    %94 = arith.maxsi %93, %c0_i32_61 : i32
    %c63_i32_62 = arith.constant 63 : i32
    %95 = arith.minsi %94, %c63_i32_62 : i32
    %c0_i32_63 = arith.constant 0 : i32
    %c0_i32_64 = arith.constant 0 : i32
    %96 = tpu.memref_slice %arg2[%95, %c0_i32_64] : memref<64x128xf32, #tpu.memory_space<any>> -> memref<1x128xf32, #tpu.memory_space<any>>
    %c10_i32 = arith.constant 10 : i32
    %c0_i32_65 = arith.constant 0 : i32
    %97 = tpu.memref_slice %arg8[%c10_i32, %c0_i32_65] : memref<32x128xf32, #tpu.memory_space<vmem>> -> memref<1x128xf32, #tpu.memory_space<vmem>>
    %98 = tpu.memref_slice %arg9[%c0_i32_63] : memref<2x!tpu.dma_semaphore, #tpu.memory_space<semaphore_mem>> -> memref<1x!tpu.dma_semaphore, #tpu.memory_space<semaphore_mem>>
    %99 = tpu.memref_squeeze %98 : memref<1x!tpu.dma_semaphore, #tpu.memory_space<semaphore_mem>> -> memref<!tpu.dma_semaphore, #tpu.memory_space<semaphore_mem>>
    tpu.enqueue_dma source(%96 : memref<1x128xf32, #tpu.memory_space<any>>) target(%97 : memref<1x128xf32, #tpu.memory_space<vmem>>) target_semaphore(%99 : memref<!tpu.dma_semaphore, #tpu.memory_space<semaphore_mem>>)
    %c0_i32_66 = arith.constant 0 : i32
    %100 = arith.addi %0, %c0_i32_66 : i32
    %101 = arith.index_cast %100 : i32 to index
    %c11 = arith.constant 11 : index
    %102 = memref.load %arg1[%101, %c11] : memref<4x16xi32, #tpu.memory_space<smem>>
    %c0_i32_67 = arith.constant 0 : i32
    %103 = arith.maxsi %102, %c0_i32_67 : i32
    %c63_i32_68 = arith.constant 63 : i32
    %104 = arith.minsi %103, %c63_i32_68 : i32
    %c0_i32_69 = arith.constant 0 : i32
    %c0_i32_70 = arith.constant 0 : i32
    %105 = tpu.memref_slice %arg2[%104, %c0_i32_70] : memref<64x128xf32, #tpu.memory_space<any>> -> memref<1x128xf32, #tpu.memory_space<any>>
    %c11_i32 = arith.constant 11 : i32
    %c0_i32_71 = arith.constant 0 : i32
    %106 = tpu.memref_slice %arg8[%c11_i32, %c0_i32_71] : memref<32x128xf32, #tpu.memory_space<vmem>> -> memref<1x128xf32, #tpu.memory_space<vmem>>
    %107 = tpu.memref_slice %arg9[%c0_i32_69] : memref<2x!tpu.dma_semaphore, #tpu.memory_space<semaphore_mem>> -> memref<1x!tpu.dma_semaphore, #tpu.memory_space<semaphore_mem>>
    %108 = tpu.memref_squeeze %107 : memref<1x!tpu.dma_semaphore, #tpu.memory_space<semaphore_mem>> -> memref<!tpu.dma_semaphore, #tpu.memory_space<semaphore_mem>>
    tpu.enqueue_dma source(%105 : memref<1x128xf32, #tpu.memory_space<any>>) target(%106 : memref<1x128xf32, #tpu.memory_space<vmem>>) target_semaphore(%108 : memref<!tpu.dma_semaphore, #tpu.memory_space<semaphore_mem>>)
    %c0_i32_72 = arith.constant 0 : i32
    %109 = arith.addi %0, %c0_i32_72 : i32
    %110 = arith.index_cast %109 : i32 to index
    %c12 = arith.constant 12 : index
    %111 = memref.load %arg1[%110, %c12] : memref<4x16xi32, #tpu.memory_space<smem>>
    %c0_i32_73 = arith.constant 0 : i32
    %112 = arith.maxsi %111, %c0_i32_73 : i32
    %c63_i32_74 = arith.constant 63 : i32
    %113 = arith.minsi %112, %c63_i32_74 : i32
    %c0_i32_75 = arith.constant 0 : i32
    %c0_i32_76 = arith.constant 0 : i32
    %114 = tpu.memref_slice %arg2[%113, %c0_i32_76] : memref<64x128xf32, #tpu.memory_space<any>> -> memref<1x128xf32, #tpu.memory_space<any>>
    %c12_i32 = arith.constant 12 : i32
    %c0_i32_77 = arith.constant 0 : i32
    %115 = tpu.memref_slice %arg8[%c12_i32, %c0_i32_77] : memref<32x128xf32, #tpu.memory_space<vmem>> -> memref<1x128xf32, #tpu.memory_space<vmem>>
    %116 = tpu.memref_slice %arg9[%c0_i32_75] : memref<2x!tpu.dma_semaphore, #tpu.memory_space<semaphore_mem>> -> memref<1x!tpu.dma_semaphore, #tpu.memory_space<semaphore_mem>>
    %117 = tpu.memref_squeeze %116 : memref<1x!tpu.dma_semaphore, #tpu.memory_space<semaphore_mem>> -> memref<!tpu.dma_semaphore, #tpu.memory_space<semaphore_mem>>
    tpu.enqueue_dma source(%114 : memref<1x128xf32, #tpu.memory_space<any>>) target(%115 : memref<1x128xf32, #tpu.memory_space<vmem>>) target_semaphore(%117 : memref<!tpu.dma_semaphore, #tpu.memory_space<semaphore_mem>>)
    %c0_i32_78 = arith.constant 0 : i32
    %118 = arith.addi %0, %c0_i32_78 : i32
    %119 = arith.index_cast %118 : i32 to index
    %c13 = arith.constant 13 : index
    %120 = memref.load %arg1[%119, %c13] : memref<4x16xi32, #tpu.memory_space<smem>>
    %c0_i32_79 = arith.constant 0 : i32
    %121 = arith.maxsi %120, %c0_i32_79 : i32
    %c63_i32_80 = arith.constant 63 : i32
    %122 = arith.minsi %121, %c63_i32_80 : i32
    %c0_i32_81 = arith.constant 0 : i32
    %c0_i32_82 = arith.constant 0 : i32
    %123 = tpu.memref_slice %arg2[%122, %c0_i32_82] : memref<64x128xf32, #tpu.memory_space<any>> -> memref<1x128xf32, #tpu.memory_space<any>>
    %c13_i32 = arith.constant 13 : i32
    %c0_i32_83 = arith.constant 0 : i32
    %124 = tpu.memref_slice %arg8[%c13_i32, %c0_i32_83] : memref<32x128xf32, #tpu.memory_space<vmem>> -> memref<1x128xf32, #tpu.memory_space<vmem>>
    %125 = tpu.memref_slice %arg9[%c0_i32_81] : memref<2x!tpu.dma_semaphore, #tpu.memory_space<semaphore_mem>> -> memref<1x!tpu.dma_semaphore, #tpu.memory_space<semaphore_mem>>
    %126 = tpu.memref_squeeze %125 : memref<1x!tpu.dma_semaphore, #tpu.memory_space<semaphore_mem>> -> memref<!tpu.dma_semaphore, #tpu.memory_space<semaphore_mem>>
    tpu.enqueue_dma source(%123 : memref<1x128xf32, #tpu.memory_space<any>>) target(%124 : memref<1x128xf32, #tpu.memory_space<vmem>>) target_semaphore(%126 : memref<!tpu.dma_semaphore, #tpu.memory_space<semaphore_mem>>)
    %c0_i32_84 = arith.constant 0 : i32
    %127 = arith.addi %0, %c0_i32_84 : i32
    %128 = arith.index_cast %127 : i32 to index
    %c14 = arith.constant 14 : index
    %129 = memref.load %arg1[%128, %c14] : memref<4x16xi32, #tpu.memory_space<smem>>
    %c0_i32_85 = arith.constant 0 : i32
    %130 = arith.maxsi %129, %c0_i32_85 : i32
    %c63_i32_86 = arith.constant 63 : i32
    %131 = arith.minsi %130, %c63_i32_86 : i32
    %c0_i32_87 = arith.constant 0 : i32
    %c0_i32_88 = arith.constant 0 : i32
    %132 = tpu.memref_slice %arg2[%131, %c0_i32_88] : memref<64x128xf32, #tpu.memory_space<any>> -> memref<1x128xf32, #tpu.memory_space<any>>
    %c14_i32 = arith.constant 14 : i32
    %c0_i32_89 = arith.constant 0 : i32
    %133 = tpu.memref_slice %arg8[%c14_i32, %c0_i32_89] : memref<32x128xf32, #tpu.memory_space<vmem>> -> memref<1x128xf32, #tpu.memory_space<vmem>>
    %134 = tpu.memref_slice %arg9[%c0_i32_87] : memref<2x!tpu.dma_semaphore, #tpu.memory_space<semaphore_mem>> -> memref<1x!tpu.dma_semaphore, #tpu.memory_space<semaphore_mem>>
    %135 = tpu.memref_squeeze %134 : memref<1x!tpu.dma_semaphore, #tpu.memory_space<semaphore_mem>> -> memref<!tpu.dma_semaphore, #tpu.memory_space<semaphore_mem>>
    tpu.enqueue_dma source(%132 : memref<1x128xf32, #tpu.memory_space<any>>) target(%133 : memref<1x128xf32, #tpu.memory_space<vmem>>) target_semaphore(%135 : memref<!tpu.dma_semaphore, #tpu.memory_space<semaphore_mem>>)
    %c0_i32_90 = arith.constant 0 : i32
    %136 = arith.addi %0, %c0_i32_90 : i32
    %137 = arith.index_cast %136 : i32 to index
    %c15 = arith.constant 15 : index
    %138 = memref.load %arg1[%137, %c15] : memref<4x16xi32, #tpu.memory_space<smem>>
    %c0_i32_91 = arith.constant 0 : i32
    %139 = arith.maxsi %138, %c0_i32_91 : i32
    %c63_i32_92 = arith.constant 63 : i32
    %140 = arith.minsi %139, %c63_i32_92 : i32
    %c0_i32_93 = arith.constant 0 : i32
    %c0_i32_94 = arith.constant 0 : i32
    %141 = tpu.memref_slice %arg2[%140, %c0_i32_94] : memref<64x128xf32, #tpu.memory_space<any>> -> memref<1x128xf32, #tpu.memory_space<any>>
    %c15_i32 = arith.constant 15 : i32
    %c0_i32_95 = arith.constant 0 : i32
    %142 = tpu.memref_slice %arg8[%c15_i32, %c0_i32_95] : memref<32x128xf32, #tpu.memory_space<vmem>> -> memref<1x128xf32, #tpu.memory_space<vmem>>
    %143 = tpu.memref_slice %arg9[%c0_i32_93] : memref<2x!tpu.dma_semaphore, #tpu.memory_space<semaphore_mem>> -> memref<1x!tpu.dma_semaphore, #tpu.memory_space<semaphore_mem>>
    %144 = tpu.memref_squeeze %143 : memref<1x!tpu.dma_semaphore, #tpu.memory_space<semaphore_mem>> -> memref<!tpu.dma_semaphore, #tpu.memory_space<semaphore_mem>>
    tpu.enqueue_dma source(%141 : memref<1x128xf32, #tpu.memory_space<any>>) target(%142 : memref<1x128xf32, #tpu.memory_space<vmem>>) target_semaphore(%144 : memref<!tpu.dma_semaphore, #tpu.memory_space<semaphore_mem>>)
    %c1_i32_96 = arith.constant 1 : i32
    %145 = arith.addi %0, %c1_i32_96 : i32
    %146 = arith.index_cast %145 : i32 to index
    %c0_97 = arith.constant 0 : index
    %147 = memref.load %arg1[%146, %c0_97] : memref<4x16xi32, #tpu.memory_space<smem>>
    %c0_i32_98 = arith.constant 0 : i32
    %148 = arith.maxsi %147, %c0_i32_98 : i32
    %c63_i32_99 = arith.constant 63 : i32
    %149 = arith.minsi %148, %c63_i32_99 : i32
    %c1_i32_100 = arith.constant 1 : i32
    %c0_i32_101 = arith.constant 0 : i32
    %150 = tpu.memref_slice %arg2[%149, %c0_i32_101] : memref<64x128xf32, #tpu.memory_space<any>> -> memref<1x128xf32, #tpu.memory_space<any>>
    %c16_i32 = arith.constant 16 : i32
    %c0_i32_102 = arith.constant 0 : i32
    %151 = tpu.memref_slice %arg8[%c16_i32, %c0_i32_102] : memref<32x128xf32, #tpu.memory_space<vmem>> -> memref<1x128xf32, #tpu.memory_space<vmem>>
    %152 = tpu.memref_slice %arg9[%c1_i32_100] : memref<2x!tpu.dma_semaphore, #tpu.memory_space<semaphore_mem>> -> memref<1x!tpu.dma_semaphore, #tpu.memory_space<semaphore_mem>>
    %153 = tpu.memref_squeeze %152 : memref<1x!tpu.dma_semaphore, #tpu.memory_space<semaphore_mem>> -> memref<!tpu.dma_semaphore, #tpu.memory_space<semaphore_mem>>
    tpu.enqueue_dma source(%150 : memref<1x128xf32, #tpu.memory_space<any>>) target(%151 : memref<1x128xf32, #tpu.memory_space<vmem>>) target_semaphore(%153 : memref<!tpu.dma_semaphore, #tpu.memory_space<semaphore_mem>>)
    %c1_i32_103 = arith.constant 1 : i32
    %154 = arith.addi %0, %c1_i32_103 : i32
    %155 = arith.index_cast %154 : i32 to index
    %c1_104 = arith.constant 1 : index
    %156 = memref.load %arg1[%155, %c1_104] : memref<4x16xi32, #tpu.memory_space<smem>>
    %c0_i32_105 = arith.constant 0 : i32
    %157 = arith.maxsi %156, %c0_i32_105 : i32
    %c63_i32_106 = arith.constant 63 : i32
    %158 = arith.minsi %157, %c63_i32_106 : i32
    %c1_i32_107 = arith.constant 1 : i32
    %c0_i32_108 = arith.constant 0 : i32
    %159 = tpu.memref_slice %arg2[%158, %c0_i32_108] : memref<64x128xf32, #tpu.memory_space<any>> -> memref<1x128xf32, #tpu.memory_space<any>>
    %c17_i32 = arith.constant 17 : i32
    %c0_i32_109 = arith.constant 0 : i32
    %160 = tpu.memref_slice %arg8[%c17_i32, %c0_i32_109] : memref<32x128xf32, #tpu.memory_space<vmem>> -> memref<1x128xf32, #tpu.memory_space<vmem>>
    %161 = tpu.memref_slice %arg9[%c1_i32_107] : memref<2x!tpu.dma_semaphore, #tpu.memory_space<semaphore_mem>> -> memref<1x!tpu.dma_semaphore, #tpu.memory_space<semaphore_mem>>
    %162 = tpu.memref_squeeze %161 : memref<1x!tpu.dma_semaphore, #tpu.memory_space<semaphore_mem>> -> memref<!tpu.dma_semaphore, #tpu.memory_space<semaphore_mem>>
    tpu.enqueue_dma source(%159 : memref<1x128xf32, #tpu.memory_space<any>>) target(%160 : memref<1x128xf32, #tpu.memory_space<vmem>>) target_semaphore(%162 : memref<!tpu.dma_semaphore, #tpu.memory_space<semaphore_mem>>)
    %c1_i32_110 = arith.constant 1 : i32
    %163 = arith.addi %0, %c1_i32_110 : i32
    %164 = arith.index_cast %163 : i32 to index
    %c2_111 = arith.constant 2 : index
    %165 = memref.load %arg1[%164, %c2_111] : memref<4x16xi32, #tpu.memory_space<smem>>
    %c0_i32_112 = arith.constant 0 : i32
    %166 = arith.maxsi %165, %c0_i32_112 : i32
    %c63_i32_113 = arith.constant 63 : i32
    %167 = arith.minsi %166, %c63_i32_113 : i32
    %c1_i32_114 = arith.constant 1 : i32
    %c0_i32_115 = arith.constant 0 : i32
    %168 = tpu.memref_slice %arg2[%167, %c0_i32_115] : memref<64x128xf32, #tpu.memory_space<any>> -> memref<1x128xf32, #tpu.memory_space<any>>
    %c18_i32 = arith.constant 18 : i32
    %c0_i32_116 = arith.constant 0 : i32
    %169 = tpu.memref_slice %arg8[%c18_i32, %c0_i32_116] : memref<32x128xf32, #tpu.memory_space<vmem>> -> memref<1x128xf32, #tpu.memory_space<vmem>>
    %170 = tpu.memref_slice %arg9[%c1_i32_114] : memref<2x!tpu.dma_semaphore, #tpu.memory_space<semaphore_mem>> -> memref<1x!tpu.dma_semaphore, #tpu.memory_space<semaphore_mem>>
    %171 = tpu.memref_squeeze %170 : memref<1x!tpu.dma_semaphore, #tpu.memory_space<semaphore_mem>> -> memref<!tpu.dma_semaphore, #tpu.memory_space<semaphore_mem>>
    tpu.enqueue_dma source(%168 : memref<1x128xf32, #tpu.memory_space<any>>) target(%169 : memref<1x128xf32, #tpu.memory_space<vmem>>) target_semaphore(%171 : memref<!tpu.dma_semaphore, #tpu.memory_space<semaphore_mem>>)
    %c1_i32_117 = arith.constant 1 : i32
    %172 = arith.addi %0, %c1_i32_117 : i32
    %173 = arith.index_cast %172 : i32 to index
    %c3_118 = arith.constant 3 : index
    %174 = memref.load %arg1[%173, %c3_118] : memref<4x16xi32, #tpu.memory_space<smem>>
    %c0_i32_119 = arith.constant 0 : i32
    %175 = arith.maxsi %174, %c0_i32_119 : i32
    %c63_i32_120 = arith.constant 63 : i32
    %176 = arith.minsi %175, %c63_i32_120 : i32
    %c1_i32_121 = arith.constant 1 : i32
    %c0_i32_122 = arith.constant 0 : i32
    %177 = tpu.memref_slice %arg2[%176, %c0_i32_122] : memref<64x128xf32, #tpu.memory_space<any>> -> memref<1x128xf32, #tpu.memory_space<any>>
    %c19_i32 = arith.constant 19 : i32
    %c0_i32_123 = arith.constant 0 : i32
    %178 = tpu.memref_slice %arg8[%c19_i32, %c0_i32_123] : memref<32x128xf32, #tpu.memory_space<vmem>> -> memref<1x128xf32, #tpu.memory_space<vmem>>
    %179 = tpu.memref_slice %arg9[%c1_i32_121] : memref<2x!tpu.dma_semaphore, #tpu.memory_space<semaphore_mem>> -> memref<1x!tpu.dma_semaphore, #tpu.memory_space<semaphore_mem>>
    %180 = tpu.memref_squeeze %179 : memref<1x!tpu.dma_semaphore, #tpu.memory_space<semaphore_mem>> -> memref<!tpu.dma_semaphore, #tpu.memory_space<semaphore_mem>>
    tpu.enqueue_dma source(%177 : memref<1x128xf32, #tpu.memory_space<any>>) target(%178 : memref<1x128xf32, #tpu.memory_space<vmem>>) target_semaphore(%180 : memref<!tpu.dma_semaphore, #tpu.memory_space<semaphore_mem>>)
    %c1_i32_124 = arith.constant 1 : i32
    %181 = arith.addi %0, %c1_i32_124 : i32
    %182 = arith.index_cast %181 : i32 to index
    %c4_125 = arith.constant 4 : index
    %183 = memref.load %arg1[%182, %c4_125] : memref<4x16xi32, #tpu.memory_space<smem>>
    %c0_i32_126 = arith.constant 0 : i32
    %184 = arith.maxsi %183, %c0_i32_126 : i32
    %c63_i32_127 = arith.constant 63 : i32
    %185 = arith.minsi %184, %c63_i32_127 : i32
    %c1_i32_128 = arith.constant 1 : i32
    %c0_i32_129 = arith.constant 0 : i32
    %186 = tpu.memref_slice %arg2[%185, %c0_i32_129] : memref<64x128xf32, #tpu.memory_space<any>> -> memref<1x128xf32, #tpu.memory_space<any>>
    %c20_i32 = arith.constant 20 : i32
    %c0_i32_130 = arith.constant 0 : i32
    %187 = tpu.memref_slice %arg8[%c20_i32, %c0_i32_130] : memref<32x128xf32, #tpu.memory_space<vmem>> -> memref<1x128xf32, #tpu.memory_space<vmem>>
    %188 = tpu.memref_slice %arg9[%c1_i32_128] : memref<2x!tpu.dma_semaphore, #tpu.memory_space<semaphore_mem>> -> memref<1x!tpu.dma_semaphore, #tpu.memory_space<semaphore_mem>>
    %189 = tpu.memref_squeeze %188 : memref<1x!tpu.dma_semaphore, #tpu.memory_space<semaphore_mem>> -> memref<!tpu.dma_semaphore, #tpu.memory_space<semaphore_mem>>
    tpu.enqueue_dma source(%186 : memref<1x128xf32, #tpu.memory_space<any>>) target(%187 : memref<1x128xf32, #tpu.memory_space<vmem>>) target_semaphore(%189 : memref<!tpu.dma_semaphore, #tpu.memory_space<semaphore_mem>>)
    %c1_i32_131 = arith.constant 1 : i32
    %190 = arith.addi %0, %c1_i32_131 : i32
    %191 = arith.index_cast %190 : i32 to index
    %c5_132 = arith.constant 5 : index
    %192 = memref.load %arg1[%191, %c5_132] : memref<4x16xi32, #tpu.memory_space<smem>>
    %c0_i32_133 = arith.constant 0 : i32
    %193 = arith.maxsi %192, %c0_i32_133 : i32
    %c63_i32_134 = arith.constant 63 : i32
    %194 = arith.minsi %193, %c63_i32_134 : i32
    %c1_i32_135 = arith.constant 1 : i32
    %c0_i32_136 = arith.constant 0 : i32
    %195 = tpu.memref_slice %arg2[%194, %c0_i32_136] : memref<64x128xf32, #tpu.memory_space<any>> -> memref<1x128xf32, #tpu.memory_space<any>>
    %c21_i32 = arith.constant 21 : i32
    %c0_i32_137 = arith.constant 0 : i32
    %196 = tpu.memref_slice %arg8[%c21_i32, %c0_i32_137] : memref<32x128xf32, #tpu.memory_space<vmem>> -> memref<1x128xf32, #tpu.memory_space<vmem>>
    %197 = tpu.memref_slice %arg9[%c1_i32_135] : memref<2x!tpu.dma_semaphore, #tpu.memory_space<semaphore_mem>> -> memref<1x!tpu.dma_semaphore, #tpu.memory_space<semaphore_mem>>
    %198 = tpu.memref_squeeze %197 : memref<1x!tpu.dma_semaphore, #tpu.memory_space<semaphore_mem>> -> memref<!tpu.dma_semaphore, #tpu.memory_space<semaphore_mem>>
    tpu.enqueue_dma source(%195 : memref<1x128xf32, #tpu.memory_space<any>>) target(%196 : memref<1x128xf32, #tpu.memory_space<vmem>>) target_semaphore(%198 : memref<!tpu.dma_semaphore, #tpu.memory_space<semaphore_mem>>)
    %c1_i32_138 = arith.constant 1 : i32
    %199 = arith.addi %0, %c1_i32_138 : i32
    %200 = arith.index_cast %199 : i32 to index
    %c6_139 = arith.constant 6 : index
    %201 = memref.load %arg1[%200, %c6_139] : memref<4x16xi32, #tpu.memory_space<smem>>
    %c0_i32_140 = arith.constant 0 : i32
    %202 = arith.maxsi %201, %c0_i32_140 : i32
    %c63_i32_141 = arith.constant 63 : i32
    %203 = arith.minsi %202, %c63_i32_141 : i32
    %c1_i32_142 = arith.constant 1 : i32
    %c0_i32_143 = arith.constant 0 : i32
    %204 = tpu.memref_slice %arg2[%203, %c0_i32_143] : memref<64x128xf32, #tpu.memory_space<any>> -> memref<1x128xf32, #tpu.memory_space<any>>
    %c22_i32 = arith.constant 22 : i32
    %c0_i32_144 = arith.constant 0 : i32
    %205 = tpu.memref_slice %arg8[%c22_i32, %c0_i32_144] : memref<32x128xf32, #tpu.memory_space<vmem>> -> memref<1x128xf32, #tpu.memory_space<vmem>>
    %206 = tpu.memref_slice %arg9[%c1_i32_142] : memref<2x!tpu.dma_semaphore, #tpu.memory_space<semaphore_mem>> -> memref<1x!tpu.dma_semaphore, #tpu.memory_space<semaphore_mem>>
    %207 = tpu.memref_squeeze %206 : memref<1x!tpu.dma_semaphore, #tpu.memory_space<semaphore_mem>> -> memref<!tpu.dma_semaphore, #tpu.memory_space<semaphore_mem>>
    tpu.enqueue_dma source(%204 : memref<1x128xf32, #tpu.memory_space<any>>) target(%205 : memref<1x128xf32, #tpu.memory_space<vmem>>) target_semaphore(%207 : memref<!tpu.dma_semaphore, #tpu.memory_space<semaphore_mem>>)
    %c1_i32_145 = arith.constant 1 : i32
    %208 = arith.addi %0, %c1_i32_145 : i32
    %209 = arith.index_cast %208 : i32 to index
    %c7_146 = arith.constant 7 : index
    %210 = memref.load %arg1[%209, %c7_146] : memref<4x16xi32, #tpu.memory_space<smem>>
    %c0_i32_147 = arith.constant 0 : i32
    %211 = arith.maxsi %210, %c0_i32_147 : i32
    %c63_i32_148 = arith.constant 63 : i32
    %212 = arith.minsi %211, %c63_i32_148 : i32
    %c1_i32_149 = arith.constant 1 : i32
    %c0_i32_150 = arith.constant 0 : i32
    %213 = tpu.memref_slice %arg2[%212, %c0_i32_150] : memref<64x128xf32, #tpu.memory_space<any>> -> memref<1x128xf32, #tpu.memory_space<any>>
    %c23_i32 = arith.constant 23 : i32
    %c0_i32_151 = arith.constant 0 : i32
    %214 = tpu.memref_slice %arg8[%c23_i32, %c0_i32_151] : memref<32x128xf32, #tpu.memory_space<vmem>> -> memref<1x128xf32, #tpu.memory_space<vmem>>
    %215 = tpu.memref_slice %arg9[%c1_i32_149] : memref<2x!tpu.dma_semaphore, #tpu.memory_space<semaphore_mem>> -> memref<1x!tpu.dma_semaphore, #tpu.memory_space<semaphore_mem>>
    %216 = tpu.memref_squeeze %215 : memref<1x!tpu.dma_semaphore, #tpu.memory_space<semaphore_mem>> -> memref<!tpu.dma_semaphore, #tpu.memory_space<semaphore_mem>>
    tpu.enqueue_dma source(%213 : memref<1x128xf32, #tpu.memory_space<any>>) target(%214 : memref<1x128xf32, #tpu.memory_space<vmem>>) target_semaphore(%216 : memref<!tpu.dma_semaphore, #tpu.memory_space<semaphore_mem>>)
    %c1_i32_152 = arith.constant 1 : i32
    %217 = arith.addi %0, %c1_i32_152 : i32
    %218 = arith.index_cast %217 : i32 to index
    %c8_153 = arith.constant 8 : index
    %219 = memref.load %arg1[%218, %c8_153] : memref<4x16xi32, #tpu.memory_space<smem>>
    %c0_i32_154 = arith.constant 0 : i32
    %220 = arith.maxsi %219, %c0_i32_154 : i32
    %c63_i32_155 = arith.constant 63 : i32
    %221 = arith.minsi %220, %c63_i32_155 : i32
    %c1_i32_156 = arith.constant 1 : i32
    %c0_i32_157 = arith.constant 0 : i32
    %222 = tpu.memref_slice %arg2[%221, %c0_i32_157] : memref<64x128xf32, #tpu.memory_space<any>> -> memref<1x128xf32, #tpu.memory_space<any>>
    %c24_i32 = arith.constant 24 : i32
    %c0_i32_158 = arith.constant 0 : i32
    %223 = tpu.memref_slice %arg8[%c24_i32, %c0_i32_158] : memref<32x128xf32, #tpu.memory_space<vmem>> -> memref<1x128xf32, #tpu.memory_space<vmem>>
    %224 = tpu.memref_slice %arg9[%c1_i32_156] : memref<2x!tpu.dma_semaphore, #tpu.memory_space<semaphore_mem>> -> memref<1x!tpu.dma_semaphore, #tpu.memory_space<semaphore_mem>>
    %225 = tpu.memref_squeeze %224 : memref<1x!tpu.dma_semaphore, #tpu.memory_space<semaphore_mem>> -> memref<!tpu.dma_semaphore, #tpu.memory_space<semaphore_mem>>
    tpu.enqueue_dma source(%222 : memref<1x128xf32, #tpu.memory_space<any>>) target(%223 : memref<1x128xf32, #tpu.memory_space<vmem>>) target_semaphore(%225 : memref<!tpu.dma_semaphore, #tpu.memory_space<semaphore_mem>>)
    %c1_i32_159 = arith.constant 1 : i32
    %226 = arith.addi %0, %c1_i32_159 : i32
    %227 = arith.index_cast %226 : i32 to index
    %c9_160 = arith.constant 9 : index
    %228 = memref.load %arg1[%227, %c9_160] : memref<4x16xi32, #tpu.memory_space<smem>>
    %c0_i32_161 = arith.constant 0 : i32
    %229 = arith.maxsi %228, %c0_i32_161 : i32
    %c63_i32_162 = arith.constant 63 : i32
    %230 = arith.minsi %229, %c63_i32_162 : i32
    %c1_i32_163 = arith.constant 1 : i32
    %c0_i32_164 = arith.constant 0 : i32
    %231 = tpu.memref_slice %arg2[%230, %c0_i32_164] : memref<64x128xf32, #tpu.memory_space<any>> -> memref<1x128xf32, #tpu.memory_space<any>>
    %c25_i32 = arith.constant 25 : i32
    %c0_i32_165 = arith.constant 0 : i32
    %232 = tpu.memref_slice %arg8[%c25_i32, %c0_i32_165] : memref<32x128xf32, #tpu.memory_space<vmem>> -> memref<1x128xf32, #tpu.memory_space<vmem>>
    %233 = tpu.memref_slice %arg9[%c1_i32_163] : memref<2x!tpu.dma_semaphore, #tpu.memory_space<semaphore_mem>> -> memref<1x!tpu.dma_semaphore, #tpu.memory_space<semaphore_mem>>
    %234 = tpu.memref_squeeze %233 : memref<1x!tpu.dma_semaphore, #tpu.memory_space<semaphore_mem>> -> memref<!tpu.dma_semaphore, #tpu.memory_space<semaphore_mem>>
    tpu.enqueue_dma source(%231 : memref<1x128xf32, #tpu.memory_space<any>>) target(%232 : memref<1x128xf32, #tpu.memory_space<vmem>>) target_semaphore(%234 : memref<!tpu.dma_semaphore, #tpu.memory_space<semaphore_mem>>)
    %c1_i32_166 = arith.constant 1 : i32
    %235 = arith.addi %0, %c1_i32_166 : i32
    %236 = arith.index_cast %235 : i32 to index
    %c10_167 = arith.constant 10 : index
    %237 = memref.load %arg1[%236, %c10_167] : memref<4x16xi32, #tpu.memory_space<smem>>
    %c0_i32_168 = arith.constant 0 : i32
    %238 = arith.maxsi %237, %c0_i32_168 : i32
    %c63_i32_169 = arith.constant 63 : i32
    %239 = arith.minsi %238, %c63_i32_169 : i32
    %c1_i32_170 = arith.constant 1 : i32
    %c0_i32_171 = arith.constant 0 : i32
    %240 = tpu.memref_slice %arg2[%239, %c0_i32_171] : memref<64x128xf32, #tpu.memory_space<any>> -> memref<1x128xf32, #tpu.memory_space<any>>
    %c26_i32 = arith.constant 26 : i32
    %c0_i32_172 = arith.constant 0 : i32
    %241 = tpu.memref_slice %arg8[%c26_i32, %c0_i32_172] : memref<32x128xf32, #tpu.memory_space<vmem>> -> memref<1x128xf32, #tpu.memory_space<vmem>>
    %242 = tpu.memref_slice %arg9[%c1_i32_170] : memref<2x!tpu.dma_semaphore, #tpu.memory_space<semaphore_mem>> -> memref<1x!tpu.dma_semaphore, #tpu.memory_space<semaphore_mem>>
    %243 = tpu.memref_squeeze %242 : memref<1x!tpu.dma_semaphore, #tpu.memory_space<semaphore_mem>> -> memref<!tpu.dma_semaphore, #tpu.memory_space<semaphore_mem>>
    tpu.enqueue_dma source(%240 : memref<1x128xf32, #tpu.memory_space<any>>) target(%241 : memref<1x128xf32, #tpu.memory_space<vmem>>) target_semaphore(%243 : memref<!tpu.dma_semaphore, #tpu.memory_space<semaphore_mem>>)
    %c1_i32_173 = arith.constant 1 : i32
    %244 = arith.addi %0, %c1_i32_173 : i32
    %245 = arith.index_cast %244 : i32 to index
    %c11_174 = arith.constant 11 : index
    %246 = memref.load %arg1[%245, %c11_174] : memref<4x16xi32, #tpu.memory_space<smem>>
    %c0_i32_175 = arith.constant 0 : i32
    %247 = arith.maxsi %246, %c0_i32_175 : i32
    %c63_i32_176 = arith.constant 63 : i32
    %248 = arith.minsi %247, %c63_i32_176 : i32
    %c1_i32_177 = arith.constant 1 : i32
    %c0_i32_178 = arith.constant 0 : i32
    %249 = tpu.memref_slice %arg2[%248, %c0_i32_178] : memref<64x128xf32, #tpu.memory_space<any>> -> memref<1x128xf32, #tpu.memory_space<any>>
    %c27_i32 = arith.constant 27 : i32
    %c0_i32_179 = arith.constant 0 : i32
    %250 = tpu.memref_slice %arg8[%c27_i32, %c0_i32_179] : memref<32x128xf32, #tpu.memory_space<vmem>> -> memref<1x128xf32, #tpu.memory_space<vmem>>
    %251 = tpu.memref_slice %arg9[%c1_i32_177] : memref<2x!tpu.dma_semaphore, #tpu.memory_space<semaphore_mem>> -> memref<1x!tpu.dma_semaphore, #tpu.memory_space<semaphore_mem>>
    %252 = tpu.memref_squeeze %251 : memref<1x!tpu.dma_semaphore, #tpu.memory_space<semaphore_mem>> -> memref<!tpu.dma_semaphore, #tpu.memory_space<semaphore_mem>>
    tpu.enqueue_dma source(%249 : memref<1x128xf32, #tpu.memory_space<any>>) target(%250 : memref<1x128xf32, #tpu.memory_space<vmem>>) target_semaphore(%252 : memref<!tpu.dma_semaphore, #tpu.memory_space<semaphore_mem>>)
    %c1_i32_180 = arith.constant 1 : i32
    %253 = arith.addi %0, %c1_i32_180 : i32
    %254 = arith.index_cast %253 : i32 to index
    %c12_181 = arith.constant 12 : index
    %255 = memref.load %arg1[%254, %c12_181] : memref<4x16xi32, #tpu.memory_space<smem>>
    %c0_i32_182 = arith.constant 0 : i32
    %256 = arith.maxsi %255, %c0_i32_182 : i32
    %c63_i32_183 = arith.constant 63 : i32
    %257 = arith.minsi %256, %c63_i32_183 : i32
    %c1_i32_184 = arith.constant 1 : i32
    %c0_i32_185 = arith.constant 0 : i32
    %258 = tpu.memref_slice %arg2[%257, %c0_i32_185] : memref<64x128xf32, #tpu.memory_space<any>> -> memref<1x128xf32, #tpu.memory_space<any>>
    %c28_i32 = arith.constant 28 : i32
    %c0_i32_186 = arith.constant 0 : i32
    %259 = tpu.memref_slice %arg8[%c28_i32, %c0_i32_186] : memref<32x128xf32, #tpu.memory_space<vmem>> -> memref<1x128xf32, #tpu.memory_space<vmem>>
    %260 = tpu.memref_slice %arg9[%c1_i32_184] : memref<2x!tpu.dma_semaphore, #tpu.memory_space<semaphore_mem>> -> memref<1x!tpu.dma_semaphore, #tpu.memory_space<semaphore_mem>>
    %261 = tpu.memref_squeeze %260 : memref<1x!tpu.dma_semaphore, #tpu.memory_space<semaphore_mem>> -> memref<!tpu.dma_semaphore, #tpu.memory_space<semaphore_mem>>
    tpu.enqueue_dma source(%258 : memref<1x128xf32, #tpu.memory_space<any>>) target(%259 : memref<1x128xf32, #tpu.memory_space<vmem>>) target_semaphore(%261 : memref<!tpu.dma_semaphore, #tpu.memory_space<semaphore_mem>>)
    %c1_i32_187 = arith.constant 1 : i32
    %262 = arith.addi %0, %c1_i32_187 : i32
    %263 = arith.index_cast %262 : i32 to index
    %c13_188 = arith.constant 13 : index
    %264 = memref.load %arg1[%263, %c13_188] : memref<4x16xi32, #tpu.memory_space<smem>>
    %c0_i32_189 = arith.constant 0 : i32
    %265 = arith.maxsi %264, %c0_i32_189 : i32
    %c63_i32_190 = arith.constant 63 : i32
    %266 = arith.minsi %265, %c63_i32_190 : i32
    %c1_i32_191 = arith.constant 1 : i32
    %c0_i32_192 = arith.constant 0 : i32
    %267 = tpu.memref_slice %arg2[%266, %c0_i32_192] : memref<64x128xf32, #tpu.memory_space<any>> -> memref<1x128xf32, #tpu.memory_space<any>>
    %c29_i32 = arith.constant 29 : i32
    %c0_i32_193 = arith.constant 0 : i32
    %268 = tpu.memref_slice %arg8[%c29_i32, %c0_i32_193] : memref<32x128xf32, #tpu.memory_space<vmem>> -> memref<1x128xf32, #tpu.memory_space<vmem>>
    %269 = tpu.memref_slice %arg9[%c1_i32_191] : memref<2x!tpu.dma_semaphore, #tpu.memory_space<semaphore_mem>> -> memref<1x!tpu.dma_semaphore, #tpu.memory_space<semaphore_mem>>
    %270 = tpu.memref_squeeze %269 : memref<1x!tpu.dma_semaphore, #tpu.memory_space<semaphore_mem>> -> memref<!tpu.dma_semaphore, #tpu.memory_space<semaphore_mem>>
    tpu.enqueue_dma source(%267 : memref<1x128xf32, #tpu.memory_space<any>>) target(%268 : memref<1x128xf32, #tpu.memory_space<vmem>>) target_semaphore(%270 : memref<!tpu.dma_semaphore, #tpu.memory_space<semaphore_mem>>)
    %c1_i32_194 = arith.constant 1 : i32
    %271 = arith.addi %0, %c1_i32_194 : i32
    %272 = arith.index_cast %271 : i32 to index
    %c14_195 = arith.constant 14 : index
    %273 = memref.load %arg1[%272, %c14_195] : memref<4x16xi32, #tpu.memory_space<smem>>
    %c0_i32_196 = arith.constant 0 : i32
    %274 = arith.maxsi %273, %c0_i32_196 : i32
    %c63_i32_197 = arith.constant 63 : i32
    %275 = arith.minsi %274, %c63_i32_197 : i32
    %c1_i32_198 = arith.constant 1 : i32
    %c0_i32_199 = arith.constant 0 : i32
    %276 = tpu.memref_slice %arg2[%275, %c0_i32_199] : memref<64x128xf32, #tpu.memory_space<any>> -> memref<1x128xf32, #tpu.memory_space<any>>
    %c30_i32 = arith.constant 30 : i32
    %c0_i32_200 = arith.constant 0 : i32
    %277 = tpu.memref_slice %arg8[%c30_i32, %c0_i32_200] : memref<32x128xf32, #tpu.memory_space<vmem>> -> memref<1x128xf32, #tpu.memory_space<vmem>>
    %278 = tpu.memref_slice %arg9[%c1_i32_198] : memref<2x!tpu.dma_semaphore, #tpu.memory_space<semaphore_mem>> -> memref<1x!tpu.dma_semaphore, #tpu.memory_space<semaphore_mem>>
    %279 = tpu.memref_squeeze %278 : memref<1x!tpu.dma_semaphore, #tpu.memory_space<semaphore_mem>> -> memref<!tpu.dma_semaphore, #tpu.memory_space<semaphore_mem>>
    tpu.enqueue_dma source(%276 : memref<1x128xf32, #tpu.memory_space<any>>) target(%277 : memref<1x128xf32, #tpu.memory_space<vmem>>) target_semaphore(%279 : memref<!tpu.dma_semaphore, #tpu.memory_space<semaphore_mem>>)
    %c1_i32_201 = arith.constant 1 : i32
    %280 = arith.addi %0, %c1_i32_201 : i32
    %281 = arith.index_cast %280 : i32 to index
    %c15_202 = arith.constant 15 : index
    %282 = memref.load %arg1[%281, %c15_202] : memref<4x16xi32, #tpu.memory_space<smem>>
    %c0_i32_203 = arith.constant 0 : i32
    %283 = arith.maxsi %282, %c0_i32_203 : i32
    %c63_i32_204 = arith.constant 63 : i32
    %284 = arith.minsi %283, %c63_i32_204 : i32
    %c1_i32_205 = arith.constant 1 : i32
    %c0_i32_206 = arith.constant 0 : i32
    %285 = tpu.memref_slice %arg2[%284, %c0_i32_206] : memref<64x128xf32, #tpu.memory_space<any>> -> memref<1x128xf32, #tpu.memory_space<any>>
    %c31_i32 = arith.constant 31 : i32
    %c0_i32_207 = arith.constant 0 : i32
    %286 = tpu.memref_slice %arg8[%c31_i32, %c0_i32_207] : memref<32x128xf32, #tpu.memory_space<vmem>> -> memref<1x128xf32, #tpu.memory_space<vmem>>
    %287 = tpu.memref_slice %arg9[%c1_i32_205] : memref<2x!tpu.dma_semaphore, #tpu.memory_space<semaphore_mem>> -> memref<1x!tpu.dma_semaphore, #tpu.memory_space<semaphore_mem>>
    %288 = tpu.memref_squeeze %287 : memref<1x!tpu.dma_semaphore, #tpu.memory_space<semaphore_mem>> -> memref<!tpu.dma_semaphore, #tpu.memory_space<semaphore_mem>>
    tpu.enqueue_dma source(%285 : memref<1x128xf32, #tpu.memory_space<any>>) target(%286 : memref<1x128xf32, #tpu.memory_space<vmem>>) target_semaphore(%288 : memref<!tpu.dma_semaphore, #tpu.memory_space<semaphore_mem>>)
    %289 = tpu.iota {dimensions = array<i32: 0>} : vector<8x16xi32>
    %c0_i32_208 = arith.constant 0 : i32
    %c0_i32_209 = arith.constant 0 : i32
    %c0_i32_210 = arith.constant 0 : i32
    %290 = tpu.memref_slice %arg2[%c0_i32_209, %c0_i32_210] : memref<64x128xf32, #tpu.memory_space<any>> -> memref<16x128xf32, #tpu.memory_space<any>>
    %c0_i32_211 = arith.constant 0 : i32
    %c0_i32_212 = arith.constant 0 : i32
    %291 = tpu.memref_slice %arg8[%c0_i32_211, %c0_i32_212] : memref<32x128xf32, #tpu.memory_space<vmem>> -> memref<16x128xf32, #tpu.memory_space<vmem>>
    %292 = tpu.memref_slice %arg9[%c0_i32_208] : memref<2x!tpu.dma_semaphore, #tpu.memory_space<semaphore_mem>> -> memref<1x!tpu.dma_semaphore, #tpu.memory_space<semaphore_mem>>
    %293 = tpu.memref_squeeze %292 : memref<1x!tpu.dma_semaphore, #tpu.memory_space<semaphore_mem>> -> memref<!tpu.dma_semaphore, #tpu.memory_space<semaphore_mem>>
    tpu.wait_dma2 semaphore(%293 : memref<!tpu.dma_semaphore, #tpu.memory_space<semaphore_mem>>) src(%290 : memref<16x128xf32, #tpu.memory_space<any>>) dst(%291 : memref<16x128xf32, #tpu.memory_space<vmem>>)
    %c0_213 = arith.constant 0 : index
    %c0_214 = arith.constant 0 : index
    %294 = vector.load %arg8[%c0_213, %c0_214] : memref<32x128xf32, #tpu.memory_space<vmem>>, vector<16x128xf32>
    %c0_215 = arith.constant 0 : index
    %c0_216 = arith.constant 0 : index
    %295 = vector.load %arg4[%c0_215, %c0_216] : memref<16x128xf32, #tpu.memory_space<vmem>>, vector<16x128xf32>
    %296 = arith.addf %294, %295 : vector<16x128xf32>
    %cst = arith.constant dense<0.000000e+00> : vector<16xf32>
    %297 = vector.multi_reduction <add>, %296, %cst [1] : vector<16x128xf32> to vector<16xf32>
    %298 = vector.shape_cast %297 : vector<16xf32> to vector<16x1xf32>
    %cst_217 = arith.constant 7.812500e-03 : f32
    %299 = vector.broadcast %cst_217 : f32 to vector<16x1xf32>
    %300 = arith.mulf %298, %299 : vector<16x1xf32>
    %301 = arith.mulf %296, %296 : vector<16x128xf32>
    %cst_218 = arith.constant dense<0.000000e+00> : vector<16xf32>
    %302 = vector.multi_reduction <add>, %301, %cst_218 [1] : vector<16x128xf32> to vector<16xf32>
    %303 = vector.shape_cast %302 : vector<16xf32> to vector<16x1xf32>
    %cst_219 = arith.constant 7.812500e-03 : f32
    %304 = vector.broadcast %cst_219 : f32 to vector<16x1xf32>
    %305 = arith.mulf %303, %304 : vector<16x1xf32>
    %306 = arith.mulf %300, %300 : vector<16x1xf32>
    %307 = arith.subf %305, %306 : vector<16x1xf32>
    %cst_220 = arith.constant 0.000000e+00 : f32
    %308 = vector.broadcast %cst_220 : f32 to vector<16x1xf32>
    %309 = arith.maximumf %307, %308 : vector<16x1xf32>
    %310 = vector.broadcast %300 : vector<16x1xf32> to vector<16x128xf32>
    %311 = arith.subf %296, %310 : vector<16x128xf32>
    %cst_221 = arith.constant 9.99999996E-13 : f32
    %312 = vector.broadcast %cst_221 : f32 to vector<16x1xf32>
    %313 = arith.addf %309, %312 : vector<16x1xf32>
    %314 = math.rsqrt %313 : vector<16x1xf32>
    %315 = vector.broadcast %314 : vector<16x1xf32> to vector<16x128xf32>
    %316 = arith.mulf %311, %315 : vector<16x128xf32>
    %c0_222 = arith.constant 0 : index
    %c0_223 = arith.constant 0 : index
    %317 = vector.load %arg5[%c0_222, %c0_223] : memref<1x128xf32, #tpu.memory_space<vmem>>, vector<1x128xf32>
    %318 = vector.broadcast %317 : vector<1x128xf32> to vector<16x128xf32>
    %319 = arith.mulf %316, %318 : vector<16x128xf32>
    %c0_224 = arith.constant 0 : index
    %c0_225 = arith.constant 0 : index
    %320 = vector.load %arg6[%c0_224, %c0_225] : memref<1x128xf32, #tpu.memory_space<vmem>>, vector<1x128xf32>
    %321 = vector.broadcast %320 : vector<1x128xf32> to vector<16x128xf32>
    %322 = arith.addf %319, %321 : vector<16x128xf32>
    %c0_226 = arith.constant 0 : index
    %c0_227 = arith.constant 0 : index
    %c0_228 = arith.constant 0 : index
    %323 = vector.load %arg3[%c0_226, %c0_227, %c0_228] : memref<2x1x16xi32, #tpu.memory_space<vmem>>, vector<1x1x16xi32>
    %324 = vector.shape_cast %323 : vector<1x1x16xi32> to vector<1x16xi32>
    %325 = vector.broadcast %324 : vector<1x16xi32> to vector<8x16xi32>
    %326 = arith.cmpi eq, %325, %289 : vector<8x16xi32>
    %327 = arith.extui %326 : vector<8x16xi1> to vector<8x16xi32>
    %328 = arith.sitofp %327 : vector<8x16xi32> to vector<8x16xf32>
    %329 = arith.truncf %328 : vector<8x16xf32> to vector<8x16xbf16>
    %330 = arith.extui %326 : vector<8x16xi1> to vector<8x16xi32>
    %331 = arith.sitofp %330 : vector<8x16xi32> to vector<8x16xf32>
    %cst_229 = arith.constant dense<0.000000e+00> : vector<8xf32>
    %332 = vector.multi_reduction <add>, %331, %cst_229 [1] : vector<8x16xf32> to vector<8xf32>
    %333 = vector.shape_cast %332 : vector<8xf32> to vector<8x1xf32>
    %334 = arith.truncf %322 : vector<16x128xf32> to vector<16x128xbf16>
    %cst_230 = arith.constant dense<0.000000e+00> : vector<8x128xf32>
    %335 = tpu.matmul %329, %334, %cst_230 {dimension_numbers = #tpu.dot_dimension_numbers<[1], [0], [0], [1], [0, 0, 1, 1], [], []>} : vector<8x16xbf16>, vector<16x128xbf16>, vector<8x128xf32> -> vector<8x128xf32>
    %cst_231 = arith.constant 1.000000e+00 : f32
    %336 = vector.broadcast %cst_231 : f32 to vector<8x1xf32>
    %337 = arith.maximumf %333, %336 : vector<8x1xf32>
    %338 = tpu.reciprocal %337 {approx = true} : vector<8x1xf32> -> vector<8x1xf32>
    %339 = vector.broadcast %338 : vector<8x1xf32> to vector<8x128xf32>
    %340 = arith.mulf %335, %339 : vector<8x128xf32>
    %c0_232 = arith.constant 0 : index
    %c0_233 = arith.constant 0 : index
    %c0_234 = arith.constant 0 : index
    %341 = vector.load %arg7[%c0_232, %c0_233, %c0_234] : memref<2x8x128xf32, #tpu.memory_space<vmem>>, vector<1x8x128xf32>
    %342 = vector.shape_cast %341 : vector<1x8x128xf32> to vector<8x128xf32>
    %343 = vector.shape_cast %340 : vector<8x128xf32> to vector<1x8x128xf32>
    tpu.vector_store %arg7[%c0_232, %c0_233, %c0_234], %343 {strides = array<i32>} : memref<2x8x128xf32, #tpu.memory_space<vmem>>, vector<1x8x128xf32>,
    %c1_i32_235 = arith.constant 1 : i32
    %c0_i32_236 = arith.constant 0 : i32
    %c0_i32_237 = arith.constant 0 : i32
    %344 = tpu.memref_slice %arg2[%c0_i32_236, %c0_i32_237] : memref<64x128xf32, #tpu.memory_space<any>> -> memref<16x128xf32, #tpu.memory_space<any>>
    %c16_i32_238 = arith.constant 16 : i32
    %c0_i32_239 = arith.constant 0 : i32
    %345 = tpu.memref_slice %arg8[%c16_i32_238, %c0_i32_239] : memref<32x128xf32, #tpu.memory_space<vmem>> -> memref<16x128xf32, #tpu.memory_space<vmem>>
    %346 = tpu.memref_slice %arg9[%c1_i32_235] : memref<2x!tpu.dma_semaphore, #tpu.memory_space<semaphore_mem>> -> memref<1x!tpu.dma_semaphore, #tpu.memory_space<semaphore_mem>>
    %347 = tpu.memref_squeeze %346 : memref<1x!tpu.dma_semaphore, #tpu.memory_space<semaphore_mem>> -> memref<!tpu.dma_semaphore, #tpu.memory_space<semaphore_mem>>
    tpu.wait_dma2 semaphore(%347 : memref<!tpu.dma_semaphore, #tpu.memory_space<semaphore_mem>>) src(%344 : memref<16x128xf32, #tpu.memory_space<any>>) dst(%345 : memref<16x128xf32, #tpu.memory_space<vmem>>)
    %c16 = arith.constant 16 : index
    %c0_240 = arith.constant 0 : index
    %348 = vector.load %arg8[%c16, %c0_240] : memref<32x128xf32, #tpu.memory_space<vmem>>, vector<16x128xf32>
    %c0_241 = arith.constant 0 : index
    %c0_242 = arith.constant 0 : index
    %349 = vector.load %arg4[%c0_241, %c0_242] : memref<16x128xf32, #tpu.memory_space<vmem>>, vector<16x128xf32>
    %350 = arith.addf %348, %349 : vector<16x128xf32>
    %cst_243 = arith.constant dense<0.000000e+00> : vector<16xf32>
    %351 = vector.multi_reduction <add>, %350, %cst_243 [1] : vector<16x128xf32> to vector<16xf32>
    %352 = vector.shape_cast %351 : vector<16xf32> to vector<16x1xf32>
    %cst_244 = arith.constant 7.812500e-03 : f32
    %353 = vector.broadcast %cst_244 : f32 to vector<16x1xf32>
    %354 = arith.mulf %352, %353 : vector<16x1xf32>
    %355 = arith.mulf %350, %350 : vector<16x128xf32>
    %cst_245 = arith.constant dense<0.000000e+00> : vector<16xf32>
    %356 = vector.multi_reduction <add>, %355, %cst_245 [1] : vector<16x128xf32> to vector<16xf32>
    %357 = vector.shape_cast %356 : vector<16xf32> to vector<16x1xf32>
    %cst_246 = arith.constant 7.812500e-03 : f32
    %358 = vector.broadcast %cst_246 : f32 to vector<16x1xf32>
    %359 = arith.mulf %357, %358 : vector<16x1xf32>
    %360 = arith.mulf %354, %354 : vector<16x1xf32>
    %361 = arith.subf %359, %360 : vector<16x1xf32>
    %cst_247 = arith.constant 0.000000e+00 : f32
    %362 = vector.broadcast %cst_247 : f32 to vector<16x1xf32>
    %363 = arith.maximumf %361, %362 : vector<16x1xf32>
    %364 = vector.broadcast %354 : vector<16x1xf32> to vector<16x128xf32>
    %365 = arith.subf %350, %364 : vector<16x128xf32>
    %cst_248 = arith.constant 9.99999996E-13 : f32
    %366 = vector.broadcast %cst_248 : f32 to vector<16x1xf32>
    %367 = arith.addf %363, %366 : vector<16x1xf32>
    %368 = math.rsqrt %367 : vector<16x1xf32>
    %369 = vector.broadcast %368 : vector<16x1xf32> to vector<16x128xf32>
    %370 = arith.mulf %365, %369 : vector<16x128xf32>
    %c0_249 = arith.constant 0 : index
    %c0_250 = arith.constant 0 : index
    %371 = vector.load %arg5[%c0_249, %c0_250] : memref<1x128xf32, #tpu.memory_space<vmem>>, vector<1x128xf32>
    %372 = vector.broadcast %371 : vector<1x128xf32> to vector<16x128xf32>
    %373 = arith.mulf %370, %372 : vector<16x128xf32>
    %c0_251 = arith.constant 0 : index
    %c0_252 = arith.constant 0 : index
    %374 = vector.load %arg6[%c0_251, %c0_252] : memref<1x128xf32, #tpu.memory_space<vmem>>, vector<1x128xf32>
    %375 = vector.broadcast %374 : vector<1x128xf32> to vector<16x128xf32>
    %376 = arith.addf %373, %375 : vector<16x128xf32>
    %c1_253 = arith.constant 1 : index
    %c0_254 = arith.constant 0 : index
    %c0_255 = arith.constant 0 : index
    %377 = vector.load %arg3[%c1_253, %c0_254, %c0_255] : memref<2x1x16xi32, #tpu.memory_space<vmem>>, vector<1x1x16xi32>
    %378 = vector.shape_cast %377 : vector<1x1x16xi32> to vector<1x16xi32>
    %379 = vector.broadcast %378 : vector<1x16xi32> to vector<8x16xi32>
    %380 = arith.cmpi eq, %379, %289 : vector<8x16xi32>
    %381 = arith.extui %380 : vector<8x16xi1> to vector<8x16xi32>
    %382 = arith.sitofp %381 : vector<8x16xi32> to vector<8x16xf32>
    %383 = arith.truncf %382 : vector<8x16xf32> to vector<8x16xbf16>
    %384 = arith.extui %380 : vector<8x16xi1> to vector<8x16xi32>
    %385 = arith.sitofp %384 : vector<8x16xi32> to vector<8x16xf32>
    %cst_256 = arith.constant dense<0.000000e+00> : vector<8xf32>
    %386 = vector.multi_reduction <add>, %385, %cst_256 [1] : vector<8x16xf32> to vector<8xf32>
    %387 = vector.shape_cast %386 : vector<8xf32> to vector<8x1xf32>
    %388 = arith.truncf %376 : vector<16x128xf32> to vector<16x128xbf16>
    %cst_257 = arith.constant dense<0.000000e+00> : vector<8x128xf32>
    %389 = tpu.matmul %383, %388, %cst_257 {dimension_numbers = #tpu.dot_dimension_numbers<[1], [0], [0], [1], [0, 0, 1, 1], [], []>} : vector<8x16xbf16>, vector<16x128xbf16>, vector<8x128xf32> -> vector<8x128xf32>
    %cst_258 = arith.constant 1.000000e+00 : f32
    %390 = vector.broadcast %cst_258 : f32 to vector<8x1xf32>
    %391 = arith.maximumf %387, %390 : vector<8x1xf32>
    %392 = tpu.reciprocal %391 {approx = true} : vector<8x1xf32> -> vector<8x1xf32>
    %393 = vector.broadcast %392 : vector<8x1xf32> to vector<8x128xf32>
    %394 = arith.mulf %389, %393 : vector<8x128xf32>
    %c1_259 = arith.constant 1 : index
    %c0_260 = arith.constant 0 : index
    %c0_261 = arith.constant 0 : index
    %395 = vector.load %arg7[%c1_259, %c0_260, %c0_261] : memref<2x8x128xf32, #tpu.memory_space<vmem>>, vector<1x8x128xf32>
    %396 = vector.shape_cast %395 : vector<1x8x128xf32> to vector<8x128xf32>
    %397 = vector.shape_cast %394 : vector<8x128xf32> to vector<1x8x128xf32>
    tpu.vector_store %arg7[%c1_259, %c0_260, %c0_261], %397 {strides = array<i32>} : memref<2x8x128xf32, #tpu.memory_space<vmem>>, vector<1x8x128xf32>,
    return
  }
  func.func @transform_1(%arg0: i32, %arg1: memref<4x16xi32, #tpu.memory_space<smem>>) -> (i32, i32, i32) {
    %c0_i32 = arith.constant 0 : i32
    %c0_i32_0 = arith.constant 0 : i32
    %c0_i32_1 = arith.constant 0 : i32
    return %arg0, %c0_i32, %c0_i32_0 : i32, i32, i32
  }
  func.func @transform_2(%arg0: i32, %arg1: memref<4x16xi32, #tpu.memory_space<smem>>) -> (i32, i32) {
    %c0_i32 = arith.constant 0 : i32
    %c0_i32_0 = arith.constant 0 : i32
    %c0_i32_1 = arith.constant 0 : i32
    return %c0_i32, %c0_i32_0 : i32, i32
  }
  func.func @transform_3(%arg0: i32, %arg1: memref<4x16xi32, #tpu.memory_space<smem>>) -> (i32, i32) {
    %c0_i32 = arith.constant 0 : i32
    %c0_i32_0 = arith.constant 0 : i32
    %c0_i32_1 = arith.constant 0 : i32
    return %c0_i32, %c0_i32_0 : i32, i32
  }
  func.func @transform_4(%arg0: i32, %arg1: memref<4x16xi32, #tpu.memory_space<smem>>) -> (i32, i32) {
    %c0_i32 = arith.constant 0 : i32
    %c0_i32_0 = arith.constant 0 : i32
    %c0_i32_1 = arith.constant 0 : i32
    return %c0_i32, %c0_i32_0 : i32, i32
  }
  func.func @transform_5(%arg0: i32, %arg1: memref<4x16xi32, #tpu.memory_space<smem>>) -> (i32, i32, i32) {
    %c0_i32 = arith.constant 0 : i32
    %c0_i32_0 = arith.constant 0 : i32
    %c0_i32_1 = arith.constant 0 : i32
    return %arg0, %c0_i32, %c0_i32_0 : i32, i32, i32
  }
}

</mosaic_0001>

<llo_original>
// kernel: tpu_custom_call.1
$region0: #{tpu_custom_call.1}
  #allocation0 [shape = 'u32[]', space=smem, size = 0x4, offset = 0x4, fixed_abs, tag = 'smem constant byte address 0x4 - core index']
  #allocation1 [shape = 'u32[144,128]{1,0:T(1,128)}', space=vmem, size = 0x12000, scoped, tag = 'internal scratch']
  #allocation2 [shape = 'f32[32,128]{1,0:T(8,128)}', space=vmem, size = 0x4000, scoped, tag = 'scratch operand']
  #allocation3 [shape = 's32[2]{0}', space=sflag, size = 0x8, scoped, tag = 'scratch operand']
  #allocation4 [shape = 's32[1]{0}', space=sflag, size = 0x4, scoped, tag = 'scoped memory for tpu_custom_call.1']
  #allocation5 [shape = 'u8[2048]{0}', space=smem, size = 0x800, scoped, tag = 'prefetched SMEM operand 0']
  #allocation12 [shape = 's32[]', space=sflag, size = 0x4, offset = 0, fixed_abs, tag = 'sflag constant byte address 0x0 - dummy sync flag']
  #allocation13 [shape = 's32[]', space=sflag, size = 0x4, offset = 0, fixed_abs, tag = 'sflag constant byte address 0x0 - dummy sync flag']
  #allocation14 [shape = 'u32[]', space=smem, size = 0x4, offset = 0x44, fixed_abs, tag = 'smem constant byte address 0x44 - assertion arg 0']
  #allocation15 [shape = 'u32[]', space=smem, size = 0x4, offset = 0x48, fixed_abs, tag = 'smem constant byte address 0x48 - assertion arg 1']
  #allocation16 [shape = 's32[]', space=sflag, size = 0x4, offset = 0, fixed_abs, tag = 'sflag constant byte address 0x0 - dummy sync flag']
  #allocation17 [shape = 's32[]', space=sflag, size = 0x4, offset = 0, fixed_abs, tag = 'sflag constant byte address 0x0 - dummy sync flag']
  #allocation18 [shape = 's32[]', space=sflag, size = 0x4, offset = 0, fixed_abs, tag = 'sflag constant byte address 0x0 - dummy sync flag']
  #allocation19 [shape = 's32[]', space=sflag, size = 0x4, offset = 0, fixed_abs, tag = 'sflag constant byte address 0x0 - dummy sync flag']
  #allocation20 [shape = 's32[]', space=sflag, size = 0x4, offset = 0, fixed_abs, tag = 'sflag constant byte address 0x0 - dummy sync flag']
  #allocation21 [shape = 's32[]', space=sflag, size = 0x4, offset = 0, fixed_abs, tag = 'sflag constant byte address 0x0 - dummy sync flag']
  #allocation22 [shape = 's32[]', space=sflag, size = 0x4, offset = 0, fixed_abs, tag = 'sflag constant byte address 0x0 - dummy sync flag']
  #allocation23 [shape = 's32[]', space=sflag, size = 0x4, offset = 0, fixed_abs, tag = 'sflag constant byte address 0x0 - dummy sync flag']
  #allocation24 [shape = 's32[]', space=sflag, size = 0x4, offset = 0, fixed_abs, tag = 'sflag constant byte address 0x0 - dummy sync flag']
  #allocation25 [shape = 's32[]', space=sflag, size = 0x4, offset = 0, fixed_abs, tag = 'sflag constant byte address 0x0 - dummy sync flag']
  #allocation26 [shape = 's32[]', space=sflag, size = 0x4, offset = 0, fixed_abs, tag = 'sflag constant byte address 0x0 - dummy sync flag']
  #allocation27 [shape = 's32[]', space=sflag, size = 0x4, offset = 0, fixed_abs, tag = 'sflag constant byte address 0x0 - dummy sync flag']
  #allocation28 [shape = 's32[]', space=sflag, size = 0x4, offset = 0, fixed_abs, tag = 'sflag constant byte address 0x0 - dummy sync flag']
  #allocation29 [shape = 's32[]', space=sflag, size = 0x4, offset = 0, fixed_abs, tag = 'sflag constant byte address 0x0 - dummy sync flag']
  #allocation30 [shape = 's32[]', space=sflag, size = 0x4, offset = 0, fixed_abs, tag = 'sflag constant byte address 0x0 - dummy sync flag']
  #allocation31 [shape = 's32[]', space=sflag, size = 0x4, offset = 0, fixed_abs, tag = 'sflag constant byte address 0x0 - dummy sync flag']
  #allocation32 [shape = 's32[]', space=sflag, size = 0x4, offset = 0, fixed_abs, tag = 'sflag constant byte address 0x0 - dummy sync flag']
  #allocation33 [shape = 's32[]', space=sflag, size = 0x4, offset = 0, fixed_abs, tag = 'sflag constant byte address 0x0 - dummy sync flag']
  #allocation34 [shape = 's32[]', space=sflag, size = 0x4, offset = 0, fixed_abs, tag = 'sflag constant byte address 0x0 - dummy sync flag']
  #allocation35 [shape = 's32[]', space=sflag, size = 0x4, offset = 0, fixed_abs, tag = 'sflag constant byte address 0x0 - dummy sync flag']
  #allocation36 [shape = 's32[]', space=sflag, size = 0x4, offset = 0, fixed_abs, tag = 'sflag constant byte address 0x0 - dummy sync flag']
  #allocation37 [shape = 's32[]', space=sflag, size = 0x4, offset = 0, fixed_abs, tag = 'sflag constant byte address 0x0 - dummy sync flag']
  #allocation38 [shape = 's32[]', space=sflag, size = 0x4, offset = 0, fixed_abs, tag = 'sflag constant byte address 0x0 - dummy sync flag']
  #allocation39 [shape = 's32[]', space=sflag, size = 0x4, offset = 0, fixed_abs, tag = 'sflag constant byte address 0x0 - dummy sync flag']
  #allocation40 [shape = 's32[]', space=sflag, size = 0x4, offset = 0, fixed_abs, tag = 'sflag constant byte address 0x0 - dummy sync flag']
  #allocation41 [shape = 's32[]', space=sflag, size = 0x4, offset = 0, fixed_abs, tag = 'sflag constant byte address 0x0 - dummy sync flag']
  #allocation42 [shape = 's32[]', space=sflag, size = 0x4, offset = 0, fixed_abs, tag = 'sflag constant byte address 0x0 - dummy sync flag']
  #allocation43 [shape = 's32[]', space=sflag, size = 0x4, offset = 0, fixed_abs, tag = 'sflag constant byte address 0x0 - dummy sync flag']
  #allocation44 [shape = 's32[]', space=sflag, size = 0x4, offset = 0, fixed_abs, tag = 'sflag constant byte address 0x0 - dummy sync flag']
  #allocation45 [shape = 's32[]', space=sflag, size = 0x4, offset = 0, fixed_abs, tag = 'sflag constant byte address 0x0 - dummy sync flag']
  #allocation46 [shape = 's32[]', space=sflag, size = 0x4, offset = 0, fixed_abs, tag = 'sflag constant byte address 0x0 - dummy sync flag']
  #allocation47 [shape = 's32[]', space=sflag, size = 0x4, offset = 0, fixed_abs, tag = 'sflag constant byte address 0x0 - dummy sync flag']
  #allocation48 [shape = 's32[]', space=sflag, size = 0x4, offset = 0, fixed_abs, tag = 'sflag constant byte address 0x0 - dummy sync flag']
  #allocation49 [shape = 's32[]', space=sflag, size = 0x4, offset = 0, fixed_abs, tag = 'sflag constant byte address 0x0 - dummy sync flag']
  #allocation50 [shape = 's32[]', space=sflag, size = 0x4, offset = 0, fixed_abs, tag = 'sflag constant byte address 0x0 - dummy sync flag']
  #allocation51 [shape = 's32[]', space=sflag, size = 0x4, offset = 0, fixed_abs, tag = 'sflag constant byte address 0x0 - dummy sync flag']
  #allocation52 [shape = 's32[]', space=sflag, size = 0x4, offset = 0, fixed_abs, tag = 'sflag constant byte address 0x0 - dummy sync flag']
  #allocation53 [shape = 's32[]', space=sflag, size = 0x4, offset = 0, fixed_abs, tag = 'sflag constant byte address 0x0 - dummy sync flag']
  #allocation54 [shape = 's32[]', space=sflag, size = 0x4, offset = 0, fixed_abs, tag = 'sflag constant byte address 0x0 - dummy sync flag']
  #allocation55 [shape = 's32[]', space=sflag, size = 0x4, offset = 0, fixed_abs, tag = 'sflag constant byte address 0x0 - dummy sync flag']
  #allocation56 [shape = 's32[]', space=sflag, size = 0x4, offset = 0, fixed_abs, tag = 'sflag constant byte address 0x0 - dummy sync flag']
  #allocation57 [shape = 's32[]', space=sflag, size = 0x4, offset = 0, fixed_abs, tag = 'sflag constant byte address 0x0 - dummy sync flag']
  #allocation58 [shape = 's32[]', space=sflag, size = 0x4, offset = 0, fixed_abs, tag = 'sflag constant byte address 0x0 - dummy sync flag']
  #allocation59 [shape = 's32[]', space=sflag, size = 0x4, offset = 0, fixed_abs, tag = 'sflag constant byte address 0x0 - dummy sync flag']
  #allocation60 [shape = 's32[]', space=sflag, size = 0x4, offset = 0, fixed_abs, tag = 'sflag constant byte address 0x0 - dummy sync flag']
  #allocation61 [shape = 's32[]', space=sflag, size = 0x4, offset = 0, fixed_abs, tag = 'sflag constant byte address 0x0 - dummy sync flag']
  #allocation62 [shape = 's32[]', space=sflag, size = 0x4, offset = 0, fixed_abs, tag = 'sflag constant byte address 0x0 - dummy sync flag']
  #allocation63 [shape = 's32[]', space=sflag, size = 0x4, offset = 0, fixed_abs, tag = 'sflag constant byte address 0x0 - dummy sync flag']
  #allocation64 [shape = 's32[]', space=sflag, size = 0x4, offset = 0, fixed_abs, tag = 'sflag constant byte address 0x0 - dummy sync flag']
  #allocation65 [shape = 's32[]', space=sflag, size = 0x4, offset = 0, fixed_abs, tag = 'sflag constant byte address 0x0 - dummy sync flag']
  #allocation66 [shape = 's32[]', space=sflag, size = 0x4, offset = 0, fixed_abs, tag = 'sflag constant byte address 0x0 - dummy sync flag']
  #allocation67 [shape = 's32[]', space=sflag, size = 0x4, offset = 0, fixed_abs, tag = 'sflag constant byte address 0x0 - dummy sync flag']
  #allocation68 [shape = 's32[]', space=sflag, size = 0x4, offset = 0, fixed_abs, tag = 'sflag constant byte address 0x0 - dummy sync flag']
  #allocation69 [shape = 's32[]', space=sflag, size = 0x4, offset = 0, fixed_abs, tag = 'sflag constant byte address 0x0 - dummy sync flag']
  #allocation70 [shape = 's32[]', space=sflag, size = 0x4, offset = 0, fixed_abs, tag = 'sflag constant byte address 0x0 - dummy sync flag']
  #allocation71 [shape = 's32[]', space=sflag, size = 0x4, offset = 0, fixed_abs, tag = 'sflag constant byte address 0x0 - dummy sync flag']
  #allocation72 [shape = 's32[]', space=sflag, size = 0x4, offset = 0, fixed_abs, tag = 'sflag constant byte address 0x0 - dummy sync flag']
  #allocation73 [shape = 's32[]', space=sflag, size = 0x4, offset = 0, fixed_abs, tag = 'sflag constant byte address 0x0 - dummy sync flag']
  #allocation74 [shape = 's32[]', space=sflag, size = 0x4, offset = 0, fixed_abs, tag = 'sflag constant byte address 0x0 - dummy sync flag']
  #allocation75 [shape = 's32[]', space=sflag, size = 0x4, offset = 0, fixed_abs, tag = 'sflag constant byte address 0x0 - dummy sync flag']
  #allocation76 [shape = 's32[]', space=sflag, size = 0x4, offset = 0, fixed_abs, tag = 'sflag constant byte address 0x0 - dummy sync flag']
  #allocation77 [shape = 's32[]', space=sflag, size = 0x4, offset = 0, fixed_abs, tag = 'sflag constant byte address 0x0 - dummy sync flag']
  %s0 = inlined_call_operand.hbm [shape: s32[4,16], index: 0, kind: input, shape index: {}]
  %s1 = inlined_call_operand.hbm [shape: f32[64,128], index: 1, kind: input, shape index: {}]
  %s2 = inlined_call_operand.hbm [shape: s32[4,1,16], index: 2, kind: input, shape index: {}]
  %s3 = inlined_call_operand.hbm [shape: f32[16,128], index: 3, kind: input, shape index: {}]
  %s4 = inlined_call_operand.vmem [shape: f32[1,128], index: 4, kind: input, shape index: {}]
  %s5 = inlined_call_operand.vmem [shape: f32[1,128], index: 5, kind: input, shape index: {}]
  %s6 = inlined_call_operand.hbm [shape: f32[4,8,128], index: 6, kind: output, shape index: {}]
  %s7 = sld [smem:[#allocation0]]
  $region185: #{tpu_custom_call.1} parent=0
    _
  %s9 = ssub.s32 1, %s7
  %s10 = scalar_select 0, %s9, %s7
  %12 = dma.hbm_to_smem %s0, 64, [#allocation5], [#allocation4]
  %13 = dma.done [#allocation4], 64
  %14 = sfence
  $region1: #{tpu_custom_call.1} parent=0
    #allocation6 [shape = 'u8[2048]{0}', space=vmem, size = 0x800, scoped, tag = 'input window, operand 2']
    #allocation7 [shape = 's32[2]{0}', space=sflag, size = 0x8, scoped, tag = 'scoped memory for tpu_custom_call.1']
    #allocation8 [shape = 's32[2]{0}', space=sflag, size = 0x8, scoped, tag = 'scoped memory for tpu_custom_call.1']
    #allocation9 [shape = 'u8[8192]{0}', space=vmem, size = 0x2000, scoped, tag = 'input window, operand 3, single buffered']
    #allocation10 [shape = 's32[1]{0}', space=sflag, size = 0x4, scoped, tag = 'scoped memory for tpu_custom_call.1']
    #allocation11 [shape = 'u8[16384]{0}', space=vmem, size = 0x4000, scoped, tag = 'output window, operand 0']
    %15 = vsyncpa [#allocation7], 0
    %s16 = scalar_lea.sflag [#allocation7], 1
    %17 = vsyncpa %s16, 0
    %18 = vsyncpa [#allocation10], 0
    %19 = vsyncpa [#allocation8], 0
    %s20 = scalar_lea.sflag [#allocation8], 1
    %21 = vsyncpa %s20, 0
    loop: start=0, step=1, limit=4
    $region2: #{tpu_custom_call.1} parent=1 // loop_pre_header
      _
    $region3: #{tpu_custom_call.1} parent=1 // loop_header
      %s23 = sphi 0, %s27
      %p24 = scmp.ge.s32.totalorder %s23, 4
      %s33 = sphi 0, %s35
      %s36 = sphi 0, %s33
      %s37 = sphi 0, %s36
      %s53 = sphi 0, %s37
      %s57 = sphi 0, %s57
      %s59 = sphi 0, %s57
      %s60 = sphi 0, %s59
      %s74 = sphi 0, %s60
      %s78 = sphi 0, %s78
      %s80 = sphi 0, %s78
      %s81 = sphi 0, %s80
      %s95 = sphi 0, %s81
      %s99 = sphi 0, %s99
      %s101 = sphi 0, %s99
      %s102 = sphi 0, %s101
      %s116 = sphi 0, %s102
      %s122 = sphi 0, %s124
      %s125 = sphi 0, %s122
      %s126 = sphi 0, %s125
      %s142 = sphi 0, %s126
    $region4: #{tpu_custom_call.1} parent=1 // loop_header_branch
      %26 = sbr.rel (%p24) target = $region8
    $region5: #{tpu_custom_call.1} parent=1 // loop_body
      %s28 = ssub.s32 %s23, 1
      %s29 = ssub.s32 %s23, 2
      %s30 = sadd.s32 %s23, 1
      %s31 = ssub.s32 %s23, %s30
      %p32 = scmp.eq.s32.totalorder %s31, 0
      %s34 = sadd.s32 %s33, 1
      %s35 = scalar_select %p32, %s33, %s34
      %p38 = pneg %p32
      %p39 = scmp.eq.s32.totalorder %s23, 1
      %p40 = por %p38, %p39
      %p41 = scmp.ne.s32.totalorder %s33, %s36
      %p42 = scmp.eq.s32.totalorder %s23, 0
      %p43 = por %p41, %p42
      %p44 = scmp.ne.s32.totalorder %s33, %s36
      %p45 = scmp.eq.s32.totalorder %s28, 1
      %p46 = por %p44, %p45
      %p47 = scmp.ne.s32.totalorder %s36, %s37
      %p48 = scmp.eq.s32.totalorder %s28, 0
      %p49 = por %p47, %p48
      %p50 = scmp.ne.s32.totalorder %s36, %s37
      %p51 = scmp.eq.s32.totalorder %s29, 1
      %p52 = por %p50, %p51
      %p54 = scmp.ne.s32.totalorder %s37, %s53
      %p55 = scmp.eq.s32.totalorder %s29, 0
      %p56 = por %p54, %p55
      %s58 = sadd.s32 %s57, 1
      %p61 = scmp.eq.s32.totalorder %s23, 1
      %p62 = scmp.ne.s32.totalorder %s57, %s59
      %p63 = scmp.eq.s32.totalorder %s23, 0
      %p64 = por %p62, %p63
      %p65 = scmp.ne.s32.totalorder %s57, %s59
      %p66 = scmp.eq.s32.totalorder %s28, 1
      %p67 = por %p65, %p66
      %p68 = scmp.ne.s32.totalorder %s59, %s60
      %p69 = scmp.eq.s32.totalorder %s28, 0
      %p70 = por %p68, %p69
      %p71 = scmp.ne.s32.totalorder %s59, %s60
      %p72 = scmp.eq.s32.totalorder %s29, 1
      %p73 = por %p71, %p72
      %p75 = scmp.ne.s32.totalorder %s60, %s74
      %p76 = scmp.eq.s32.totalorder %s29, 0
      %p77 = por %p75, %p76
      %s79 = sadd.s32 %s78, 1
      %p82 = scmp.eq.s32.totalorder %s23, 1
      %p83 = scmp.ne.s32.totalorder %s78, %s80
      %p84 = scmp.eq.s32.totalorder %s23, 0
      %p85 = por %p83, %p84
      %p86 = scmp.ne.s32.totalorder %s78, %s80
      %p87 = scmp.eq.s32.totalorder %s28, 1
      %p88 = por %p86, %p87
      %p89 = scmp.ne.s32.totalorder %s80, %s81
      %p90 = scmp.eq.s32.totalorder %s28, 0
      %p91 = por %p89, %p90
      %p92 = scmp.ne.s32.totalorder %s80, %s81
      %p93 = scmp.eq.s32.totalorder %s29, 1
      %p94 = por %p92, %p93
      %p96 = scmp.ne.s32.totalorder %s81, %s95
      %p97 = scmp.eq.s32.totalorder %s29, 0
      %p98 = por %p96, %p97
      %s100 = sadd.s32 %s99, 1
      %p103 = scmp.eq.s32.totalorder %s23, 1
      %p104 = scmp.ne.s32.totalorder %s99, %s101
      %p105 = scmp.eq.s32.totalorder %s23, 0
      %p106 = por %p104, %p105
      %p107 = scmp.ne.s32.totalorder %s99, %s101
      %p108 = scmp.eq.s32.totalorder %s28, 1
      %p109 = por %p107, %p108
      %p110 = scmp.ne.s32.totalorder %s101, %s102
      %p111 = scmp.eq.s32.totalorder %s28, 0
      %p112 = por %p110, %p111
      %p113 = scmp.ne.s32.totalorder %s101, %s102
      %p114 = scmp.eq.s32.totalorder %s29, 1
      %p115 = por %p113, %p114
      %p117 = scmp.ne.s32.totalorder %s102, %s116
      %p118 = scmp.eq.s32.totalorder %s29, 0
      %p119 = por %p117, %p118
      %s120 = ssub.s32 %s23, %s30
      %p121 = scmp.eq.s32.totalorder %s120, 0
      %s123 = sadd.s32 %s122, 1
      %s124 = scalar_select %p121, %s122, %s123
      %p127 = pneg %p121
      %p128 = scmp.eq.s32.totalorder %s23, 1
      %p129 = por %p127, %p128
      %p130 = scmp.ne.s32.totalorder %s122, %s125
      %p131 = scmp.eq.s32.totalorder %s23, 0
      %p132 = por %p130, %p131
      %p133 = scmp.ne.s32.totalorder %s122, %s125
      %p134 = scmp.eq.s32.totalorder %s28, 1
      %p135 = por %p133, %p134
      %p136 = scmp.ne.s32.totalorder %s125, %s126
      %p137 = scmp.eq.s32.totalorder %s28, 0
      %p138 = por %p136, %p137
      %p139 = scmp.ne.s32.totalorder %s125, %s126
      %p140 = scmp.eq.s32.totalorder %s29, 1
      %p141 = por %p139, %p140
      %p143 = scmp.ne.s32.totalorder %s126, %s142
      %p144 = scmp.eq.s32.totalorder %s29, 0
      %p145 = por %p143, %p144
      %p146 = scmp.le.s32.totalorder 1, %s23
      %p147 = scmp.lt.s32.totalorder %s23, 3
      %p148 = pnand %p146, %p147
      %p149 = pneg %p148
      // Predicated region
      $region9: #{tpu_custom_call.1} parent=5 // pred_check
        _
      $region10: #{tpu_custom_call.1} parent=5 // pred_check_branch
        %151 = sbr.rel (%p148) target = $region12
      $region11: #{tpu_custom_call.1} parent=5 // pred_region
        %s152 = ssub.s32 %s23, 1
        // Predicated region
        $region13: #{tpu_custom_call.1} parent=11 // pred_check
          %p153 = pneg %p70
        $region14: #{tpu_custom_call.1} parent=11 // pred_check_branch
          %155 = sbr.rel (%p153) target = $region16
        $region15: #{tpu_custom_call.1} parent=11 // pred_region
          %s157 = ssub.s32 256, 256
          %158 = vsyncadd [#allocation10], %s157
          %s159 = sshll.u32 [#allocation9], 4
          %s160 = int_to_ptr.vmem [resolvable:$true] %s159
          %165 = dma.hbm_to_vmem [thread:$0]  %s3, 256, %s160, [#allocation10], 128, 128, 8
        $region16: #{tpu_custom_call.1} parent=11 // pred_fallthru
          _
        // Predicated region
        $region17: #{tpu_custom_call.1} parent=11 // pred_check
          %p166 = pneg %p91
        $region18: #{tpu_custom_call.1} parent=11 // pred_check_branch
          %168 = sbr.rel (%p166) target = $region20
        $region19: #{tpu_custom_call.1} parent=11 // pred_region
          _
        $region20: #{tpu_custom_call.1} parent=11 // pred_fallthru
          _
        // Predicated region
        $region21: #{tpu_custom_call.1} parent=11 // pred_check
          %p169 = pneg %p112
        $region22: #{tpu_custom_call.1} parent=11 // pred_check_branch
          %171 = sbr.rel (%p169) target = $region24
        $region23: #{tpu_custom_call.1} parent=11 // pred_region
          _
        $region24: #{tpu_custom_call.1} parent=11 // pred_fallthru
          _
      $region12: #{tpu_custom_call.1} parent=5 // pred_fallthru
        _
      %p172 = scmp.lt.s32.totalorder %s23, 2
      // Predicated region
      $region25: #{tpu_custom_call.1} parent=5 // pred_check
        %p173 = pneg %p172
      $region26: #{tpu_custom_call.1} parent=5 // pred_check_branch
        %175 = sbr.rel (%p173) target = $region28
      $region27: #{tpu_custom_call.1} parent=5 // pred_region
        // Predicated region
        $region29: #{tpu_custom_call.1} parent=27 // pred_check
          %p176 = pneg %p43
        $region30: #{tpu_custom_call.1} parent=27 // pred_check_branch
          %178 = sbr.rel (%p176) target = $region32
        $region31: #{tpu_custom_call.1} parent=27 // pred_region
          %s179 = sand.u32 %s33, 1
          %s180 = scalar_lea.sflag [#allocation7], %s179
          %s181 = sand.u32 %s33, 1
          %s182 = smul.addr %s181, 2
          %s183 = scalar_lea.vmem [#allocation6], %s182
          %s184 = smul.u32 2, %s23
          %s186 = ssub.s32 32, 32
          %187 = vsyncadd %s180, %s186
          %s188 = smul.addr %s184, 16
          %s189 = scalar_lea.hbm %s2, %s188
          %s190 = sshll.u32 %s183, 4
          %s191 = int_to_ptr.vmem [resolvable:$true] %s190
          %196 = dma.hbm_to_vmem [thread:$0]  %s189, 32, %s191, %s180, 16, 16, 1
        $region32: #{tpu_custom_call.1} parent=27 // pred_fallthru
          _
      $region28: #{tpu_custom_call.1} parent=5 // pred_fallthru
        _
      %p197 = scmp.le.s32.totalorder 1, %s23
      %p198 = scmp.lt.s32.totalorder %s23, 3
      %p199 = pnand %p197, %p198
      %p200 = pneg %p199
      // Predicated region
      $region33: #{tpu_custom_call.1} parent=5 // pred_check
        _
      $region34: #{tpu_custom_call.1} parent=5 // pred_check_branch
        %202 = sbr.rel (%p199) target = $region36
      $region35: #{tpu_custom_call.1} parent=5 // pred_region
        %s203 = ssub.s32 %s23, 1
        %s204 = sand.u32 %s36, 1
        %s205 = scalar_lea.sflag [#allocation7], %s204
        %s206 = sand.u32 %s36, 1
        %s207 = smul.addr %s206, 2
        %s208 = scalar_lea.vmem [#allocation6], %s207
        // Predicated region
        $region37: #{tpu_custom_call.1} parent=35 // pred_check
          %p209 = pneg %p49
        $region38: #{tpu_custom_call.1} parent=35 // pred_check_branch
          %211 = sbr.rel (%p209) target = $region40
        $region39: #{tpu_custom_call.1} parent=35 // pred_region
          %212 = dma.done %s205, 32
        $region40: #{tpu_custom_call.1} parent=35 // pred_fallthru
          _
        // Predicated region
        $region41: #{tpu_custom_call.1} parent=35 // pred_check
          %p213 = pneg %p70
        $region42: #{tpu_custom_call.1} parent=35 // pred_check_branch
          %215 = sbr.rel (%p213) target = $region44
        $region43: #{tpu_custom_call.1} parent=35 // pred_region
          %216 = dma.done [#allocation10], 256
        $region44: #{tpu_custom_call.1} parent=35 // pred_fallthru
          _
        %s217 = sand.u32 %s36, 1
        %s218 = scalar_lea.sflag [#allocation7], %s217
        %s219 = sand.u32 %s36, 1
        %s220 = smul.addr %s219, 2
        %s221 = scalar_lea.vmem [#allocation6], %s220
        %p222 = pneg %p49
        %p223 = pneg %p46
        %p224 = pneg %p70
        %p225 = pneg %p67
        %p226 = pneg %p91
        %p227 = pneg %p88
        %p228 = pneg %p112
        %p229 = pneg %p109
        %p230 = pneg %p138
        %p231 = pneg %p135
        %s232 = sand.u32 %s125, 1
        %s233 = scalar_lea.sflag [#allocation8], %s232
        %s234 = sand.u32 %s125, 1
        %s235 = smul.addr %s234, 16
        %s236 = scalar_lea.vmem [#allocation11], %s235
        %s237 = smul.u32 2, %s28
        %s238 = smul.u32 2, %s28
        %s240 = smul.u32 %s28, 2
        %s241 = smul.u32 %s240, 128
        %s242 = sld [smem:[#allocation5 + %s241]]
        %p243 = scmp.gt.s32.totalorder %s242, 0
        %s244 = scalar_select %p243, %s242, 0
        %p245 = scmp.lt.s32.totalorder %s244, 63
        %s246 = scalar_select %p245, %s244, 63
        %s247 = smul.addr %s246, 16
        %s248 = scalar_lea.hbm %s1, %s247
        // Predicated region
        $region45: #{tpu_custom_call.1} parent=35 // pred_check
          _
        $region46: #{tpu_custom_call.1} parent=35 // pred_check_branch
          %250 = sbr.rel target = $region48
        $region47: #{tpu_custom_call.1} parent=35 // pred_region
          %251 = sst [smem:[#allocation14]] [#allocation13]
          %252 = sst [smem:[#allocation15]] [#allocation12]
        $region48: #{tpu_custom_call.1} parent=35 // pred_fallthru
          _
        %254 = shalt.err (0)
        %s256 = sshll.u32 [#allocation2], 4
        %s257 = int_to_ptr.vmem [resolvable:$true] %s256
        %259 = dma.hbm_to_vmem [thread:$0]  %s248, 16, %s257, [#allocation3]
        %s260 = sadd.s32 %s241, 1
        %s261 = sld [smem:[#allocation5 + %s260]]
        %p262 = scmp.gt.s32.totalorder %s261, 0
        %s263 = scalar_select %p262, %s261, 0
        %p264 = scmp.lt.s32.totalorder %s263, 63
        %s265 = scalar_select %p264, %s263, 63
        %s266 = smul.addr %s265, 16
        %s267 = scalar_lea.hbm %s1, %s266
        %s268 = scalar_lea.vmem [#allocation2], 1
        // Predicated region
        $region49: #{tpu_custom_call.1} parent=35 // pred_check
          _
        $region50: #{tpu_custom_call.1} parent=35 // pred_check_branch
          %270 = sbr.rel target = $region52
        $region51: #{tpu_custom_call.1} parent=35 // pred_region
          %271 = sst [smem:[#allocation14]] [#allocation17]
          %272 = sst [smem:[#allocation15]] [#allocation16]
        $region52: #{tpu_custom_call.1} parent=35 // pred_fallthru
          _
        %274 = shalt.err (0)
        %s276 = sshll.u32 %s268, 4
        %s277 = int_to_ptr.vmem [resolvable:$true] %s276
        %279 = dma.hbm_to_vmem [thread:$0]  %s267, 16, %s277, [#allocation3]
        %s280 = sadd.s32 %s241, 2
        %s281 = sld [smem:[#allocation5 + %s280]]
        %p282 = scmp.gt.s32.totalorder %s281, 0
        %s283 = scalar_select %p282, %s281, 0
        %p284 = scmp.lt.s32.totalorder %s283, 63
        %s285 = scalar_select %p284, %s283, 63
        %s286 = smul.addr %s285, 16
        %s287 = scalar_lea.hbm %s1, %s286
        %s288 = scalar_lea.vmem [#allocation2], 2
        // Predicated region
        $region53: #{tpu_custom_call.1} parent=35 // pred_check
          _
        $region54: #{tpu_custom_call.1} parent=35 // pred_check_branch
          %290 = sbr.rel target = $region56
        $region55: #{tpu_custom_call.1} parent=35 // pred_region
          %291 = sst [smem:[#allocation14]] [#allocation19]
          %292 = sst [smem:[#allocation15]] [#allocation18]
        $region56: #{tpu_custom_call.1} parent=35 // pred_fallthru
          _
        %294 = shalt.err (0)
        %s296 = sshll.u32 %s288, 4
        %s297 = int_to_ptr.vmem [resolvable:$true] %s296
        %299 = dma.hbm_to_vmem [thread:$0]  %s287, 16, %s297, [#allocation3]
        %s300 = sadd.s32 %s241, 3
        %s301 = sld [smem:[#allocation5 + %s300]]
        %p302 = scmp.gt.s32.totalorder %s301, 0
        %s303 = scalar_select %p302, %s301, 0
        %p304 = scmp.lt.s32.totalorder %s303, 63
        %s305 = scalar_select %p304, %s303, 63
        %s306 = smul.addr %s305, 16
        %s307 = scalar_lea.hbm %s1, %s306
        %s308 = scalar_lea.vmem [#allocation2], 3
        // Predicated region
        $region57: #{tpu_custom_call.1} parent=35 // pred_check
          _
        $region58: #{tpu_custom_call.1} parent=35 // pred_check_branch
          %310 = sbr.rel target = $region60
        $region59: #{tpu_custom_call.1} parent=35 // pred_region
          %311 = sst [smem:[#allocation14]] [#allocation21]
          %312 = sst [smem:[#allocation15]] [#allocation20]
        $region60: #{tpu_custom_call.1} parent=35 // pred_fallthru
          _
        %314 = shalt.err (0)
        %s316 = sshll.u32 %s308, 4
        %s317 = int_to_ptr.vmem [resolvable:$true] %s316
        %319 = dma.hbm_to_vmem [thread:$0]  %s307, 16, %s317, [#allocation3]
        %s320 = sadd.s32 %s241, 4
        %s321 = sld [smem:[#allocation5 + %s320]]
        %p322 = scmp.gt.s32.totalorder %s321, 0
        %s323 = scalar_select %p322, %s321, 0
        %p324 = scmp.lt.s32.totalorder %s323, 63
        %s325 = scalar_select %p324, %s323, 63
        %s326 = smul.addr %s325, 16
        %s327 = scalar_lea.hbm %s1, %s326
        %s328 = scalar_lea.vmem [#allocation2], 4
        // Predicated region
        $region61: #{tpu_custom_call.1} parent=35 // pred_check
          _
        $region62: #{tpu_custom_call.1} parent=35 // pred_check_branch
          %330 = sbr.rel target = $region64
        $region63: #{tpu_custom_call.1} parent=35 // pred_region
          %331 = sst [smem:[#allocation14]] [#allocation23]
          %332 = sst [smem:[#allocation15]] [#allocation22]
        $region64: #{tpu_custom_call.1} parent=35 // pred_fallthru
          _
        %334 = shalt.err (0)
        %s336 = sshll.u32 %s328, 4
        %s337 = int_to_ptr.vmem [resolvable:$true] %s336
        %339 = dma.hbm_to_vmem [thread:$0]  %s327, 16, %s337, [#allocation3]
        %s340 = sadd.s32 %s241, 5
        %s341 = sld [smem:[#allocation5 + %s340]]
        %p342 = scmp.gt.s32.totalorder %s341, 0
        %s343 = scalar_select %p342, %s341, 0
        %p344 = scmp.lt.s32.totalorder %s343, 63
        %s345 = scalar_select %p344, %s343, 63
        %s346 = smul.addr %s345, 16
        %s347 = scalar_lea.hbm %s1, %s346
        %s348 = scalar_lea.vmem [#allocation2], 5
        // Predicated region
        $region65: #{tpu_custom_call.1} parent=35 // pred_check
          _
        $region66: #{tpu_custom_call.1} parent=35 // pred_check_branch
          %350 = sbr.rel target = $region68
        $region67: #{tpu_custom_call.1} parent=35 // pred_region
          %351 = sst [smem:[#allocation14]] [#allocation25]
          %352 = sst [smem:[#allocation15]] [#allocation24]
        $region68: #{tpu_custom_call.1} parent=35 // pred_fallthru
          _
        %354 = shalt.err (0)
        %s356 = sshll.u32 %s348, 4
        %s357 = int_to_ptr.vmem [resolvable:$true] %s356
        %359 = dma.hbm_to_vmem [thread:$0]  %s347, 16, %s357, [#allocation3]
        %s360 = sadd.s32 %s241, 6
        %s361 = sld [smem:[#allocation5 + %s360]]
        %p362 = scmp.gt.s32.totalorder %s361, 0
        %s363 = scalar_select %p362, %s361, 0
        %p364 = scmp.lt.s32.totalorder %s363, 63
        %s365 = scalar_select %p364, %s363, 63
        %s366 = smul.addr %s365, 16
        %s367 = scalar_lea.hbm %s1, %s366
        %s368 = scalar_lea.vmem [#allocation2], 6
        // Predicated region
        $region69: #{tpu_custom_call.1} parent=35 // pred_check
          _
        $region70: #{tpu_custom_call.1} parent=35 // pred_check_branch
          %370 = sbr.rel target = $region72
        $region71: #{tpu_custom_call.1} parent=35 // pred_region
          %371 = sst [smem:[#allocation14]] [#allocation27]
          %372 = sst [smem:[#allocation15]] [#allocation26]
        $region72: #{tpu_custom_call.1} parent=35 // pred_fallthru
          _
        %374 = shalt.err (0)
        %s376 = sshll.u32 %s368, 4
        %s377 = int_to_ptr.vmem [resolvable:$true] %s376
        %379 = dma.hbm_to_vmem [thread:$0]  %s367, 16, %s377, [#allocation3]
        %s380 = sadd.s32 %s241, 7
        %s381 = sld [smem:[#allocation5 + %s380]]
        %p382 = scmp.gt.s32.totalorder %s381, 0
        %s383 = scalar_select %p382, %s381, 0
        %p384 = scmp.lt.s32.totalorder %s383, 63
        %s385 = scalar_select %p384, %s383, 63
        %s386 = smul.addr %s385, 16
        %s387 = scalar_lea.hbm %s1, %s386
        %s388 = scalar_lea.vmem [#allocation2], 7
        // Predicated region
        $region73: #{tpu_custom_call.1} parent=35 // pred_check
          _
        $region74: #{tpu_custom_call.1} parent=35 // pred_check_branch
          %390 = sbr.rel target = $region76
        $region75: #{tpu_custom_call.1} parent=35 // pred_region
          %391 = sst [smem:[#allocation14]] [#allocation29]
          %392 = sst [smem:[#allocation15]] [#allocation28]
        $region76: #{tpu_custom_call.1} parent=35 // pred_fallthru
          _
        %394 = shalt.err (0)
        %s396 = sshll.u32 %s388, 4
        %s397 = int_to_ptr.vmem [resolvable:$true] %s396
        %399 = dma.hbm_to_vmem [thread:$0]  %s387, 16, %s397, [#allocation3]
        %s400 = sadd.s32 %s241, 8
        %s401 = sld [smem:[#allocation5 + %s400]]
        %p402 = scmp.gt.s32.totalorder %s401, 0
        %s403 = scalar_select %p402, %s401, 0
        %p404 = scmp.lt.s32.totalorder %s403, 63
        %s405 = scalar_select %p404, %s403, 63
        %s406 = smul.addr %s405, 16
        %s407 = scalar_lea.hbm %s1, %s406
        %s408 = scalar_lea.vmem [#allocation2], 8
        // Predicated region
        $region77: #{tpu_custom_call.1} parent=35 // pred_check
          _
        $region78: #{tpu_custom_call.1} parent=35 // pred_check_branch
          %410 = sbr.rel target = $region80
        $region79: #{tpu_custom_call.1} parent=35 // pred_region
          %411 = sst [smem:[#allocation14]] [#allocation31]
          %412 = sst [smem:[#allocation15]] [#allocation30]
        $region80: #{tpu_custom_call.1} parent=35 // pred_fallthru
          _
        %414 = shalt.err (0)
        %s416 = sshll.u32 %s408, 4
        %s417 = int_to_ptr.vmem [resolvable:$true] %s416
        %419 = dma.hbm_to_vmem [thread:$0]  %s407, 16, %s417, [#allocation3]
        %s420 = sadd.s32 %s241, 9
        %s421 = sld [smem:[#allocation5 + %s420]]
        %p422 = scmp.gt.s32.totalorder %s421, 0
        %s423 = scalar_select %p422, %s421, 0
        %p424 = scmp.lt.s32.totalorder %s423, 63
        %s425 = scalar_select %p424, %s423, 63
        %s426 = smul.addr %s425, 16
        %s427 = scalar_lea.hbm %s1, %s426
        %s428 = scalar_lea.vmem [#allocation2], 9
        // Predicated region
        $region81: #{tpu_custom_call.1} parent=35 // pred_check
          _
        $region82: #{tpu_custom_call.1} parent=35 // pred_check_branch
          %430 = sbr.rel target = $region84
        $region83: #{tpu_custom_call.1} parent=35 // pred_region
          %431 = sst [smem:[#allocation14]] [#allocation33]
          %432 = sst [smem:[#allocation15]] [#allocation32]
        $region84: #{tpu_custom_call.1} parent=35 // pred_fallthru
          _
        %434 = shalt.err (0)
        %s436 = sshll.u32 %s428, 4
        %s437 = int_to_ptr.vmem [resolvable:$true] %s436
        %439 = dma.hbm_to_vmem [thread:$0]  %s427, 16, %s437, [#allocation3]
        %s440 = sadd.s32 %s241, 10
        %s441 = sld [smem:[#allocation5 + %s440]]
        %p442 = scmp.gt.s32.totalorder %s441, 0
        %s443 = scalar_select %p442, %s441, 0
        %p444 = scmp.lt.s32.totalorder %s443, 63
        %s445 = scalar_select %p444, %s443, 63
        %s446 = smul.addr %s445, 16
        %s447 = scalar_lea.hbm %s1, %s446
        %s448 = scalar_lea.vmem [#allocation2], 10
        // Predicated region
        $region85: #{tpu_custom_call.1} parent=35 // pred_check
          _
        $region86: #{tpu_custom_call.1} parent=35 // pred_check_branch
          %450 = sbr.rel target = $region88
        $region87: #{tpu_custom_call.1} parent=35 // pred_region
          %451 = sst [smem:[#allocation14]] [#allocation35]
          %452 = sst [smem:[#allocation15]] [#allocation34]
        $region88: #{tpu_custom_call.1} parent=35 // pred_fallthru
          _
        %454 = shalt.err (0)
        %s456 = sshll.u32 %s448, 4
        %s457 = int_to_ptr.vmem [resolvable:$true] %s456
        %459 = dma.hbm_to_vmem [thread:$0]  %s447, 16, %s457, [#allocation3]
        %s460 = sadd.s32 %s241, 11
        %s461 = sld [smem:[#allocation5 + %s460]]
        %p462 = scmp.gt.s32.totalorder %s461, 0
        %s463 = scalar_select %p462, %s461, 0
        %p464 = scmp.lt.s32.totalorder %s463, 63
        %s465 = scalar_select %p464, %s463, 63
        %s466 = smul.addr %s465, 16
        %s467 = scalar_lea.hbm %s1, %s466
        %s468 = scalar_lea.vmem [#allocation2], 11
        // Predicated region
        $region89: #{tpu_custom_call.1} parent=35 // pred_check
          _
        $region90: #{tpu_custom_call.1} parent=35 // pred_check_branch
          %470 = sbr.rel target = $region92
        $region91: #{tpu_custom_call.1} parent=35 // pred_region
          %471 = sst [smem:[#allocation14]] [#allocation37]
          %472 = sst [smem:[#allocation15]] [#allocation36]
        $region92: #{tpu_custom_call.1} parent=35 // pred_fallthru
          _
        %474 = shalt.err (0)
        %s476 = sshll.u32 %s468, 4
        %s477 = int_to_ptr.vmem [resolvable:$true] %s476
        %479 = dma.hbm_to_vmem [thread:$0]  %s467, 16, %s477, [#allocation3]
        %s480 = sadd.s32 %s241, 12
        %s481 = sld [smem:[#allocation5 + %s480]]
        %p482 = scmp.gt.s32.totalorder %s481, 0
        %s483 = scalar_select %p482, %s481, 0
        %p484 = scmp.lt.s32.totalorder %s483, 63
        %s485 = scalar_select %p484, %s483, 63
        %s486 = smul.addr %s485, 16
        %s487 = scalar_lea.hbm %s1, %s486
        %s488 = scalar_lea.vmem [#allocation2], 12
        // Predicated region
        $region93: #{tpu_custom_call.1} parent=35 // pred_check
          _
        $region94: #{tpu_custom_call.1} parent=35 // pred_check_branch
          %490 = sbr.rel target = $region96
        $region95: #{tpu_custom_call.1} parent=35 // pred_region
          %491 = sst [smem:[#allocation14]] [#allocation39]
          %492 = sst [smem:[#allocation15]] [#allocation38]
        $region96: #{tpu_custom_call.1} parent=35 // pred_fallthru
          _
        %494 = shalt.err (0)
        %s496 = sshll.u32 %s488, 4
        %s497 = int_to_ptr.vmem [resolvable:$true] %s496
        %499 = dma.hbm_to_vmem [thread:$0]  %s487, 16, %s497, [#allocation3]
        %s500 = sadd.s32 %s241, 13
        %s501 = sld [smem:[#allocation5 + %s500]]
        %p502 = scmp.gt.s32.totalorder %s501, 0
        %s503 = scalar_select %p502, %s501, 0
        %p504 = scmp.lt.s32.totalorder %s503, 63
        %s505 = scalar_select %p504, %s503, 63
        %s506 = smul.addr %s505, 16
        %s507 = scalar_lea.hbm %s1, %s506
        %s508 = scalar_lea.vmem [#allocation2], 13
        // Predicated region
        $region97: #{tpu_custom_call.1} parent=35 // pred_check
          _
        $region98: #{tpu_custom_call.1} parent=35 // pred_check_branch
          %510 = sbr.rel target = $region100
        $region99: #{tpu_custom_call.1} parent=35 // pred_region
          %511 = sst [smem:[#allocation14]] [#allocation41]
          %512 = sst [smem:[#allocation15]] [#allocation40]
        $region100: #{tpu_custom_call.1} parent=35 // pred_fallthru
          _
        %514 = shalt.err (0)
        %s516 = sshll.u32 %s508, 4
        %s517 = int_to_ptr.vmem [resolvable:$true] %s516
        %519 = dma.hbm_to_vmem [thread:$0]  %s507, 16, %s517, [#allocation3]
        %s520 = sadd.s32 %s241, 14
        %s521 = sld [smem:[#allocation5 + %s520]]
        %p522 = scmp.gt.s32.totalorder %s521, 0
        %s523 = scalar_select %p522, %s521, 0
        %p524 = scmp.lt.s32.totalorder %s523, 63
        %s525 = scalar_select %p524, %s523, 63
        %s526 = smul.addr %s525, 16
        %s527 = scalar_lea.hbm %s1, %s526
        %s528 = scalar_lea.vmem [#allocation2], 14
        // Predicated region
        $region101: #{tpu_custom_call.1} parent=35 // pred_check
          _
        $region102: #{tpu_custom_call.1} parent=35 // pred_check_branch
          %530 = sbr.rel target = $region104
        $region103: #{tpu_custom_call.1} parent=35 // pred_region
          %531 = sst [smem:[#allocation14]] [#allocation43]
          %532 = sst [smem:[#allocation15]] [#allocation42]
        $region104: #{tpu_custom_call.1} parent=35 // pred_fallthru
          _
        %534 = shalt.err (0)
        %s536 = sshll.u32 %s528, 4
        %s537 = int_to_ptr.vmem [resolvable:$true] %s536
        %539 = dma.hbm_to_vmem [thread:$0]  %s527, 16, %s537, [#allocation3]
        %s540 = sadd.s32 %s241, 15
        %s541 = sld [smem:[#allocation5 + %s540]]
        %p542 = scmp.gt.s32.totalorder %s541, 0
        %s543 = scalar_select %p542, %s541, 0
        %p544 = scmp.lt.s32.totalorder %s543, 63
        %s545 = scalar_select %p544, %s543, 63
        %s546 = smul.addr %s545, 16
        %s547 = scalar_lea.hbm %s1, %s546
        %s548 = scalar_lea.vmem [#allocation2], 15
        // Predicated region
        $region105: #{tpu_custom_call.1} parent=35 // pred_check
          _
        $region106: #{tpu_custom_call.1} parent=35 // pred_check_branch
          %550 = sbr.rel target = $region108
        $region107: #{tpu_custom_call.1} parent=35 // pred_region
          %551 = sst [smem:[#allocation14]] [#allocation45]
          %552 = sst [smem:[#allocation15]] [#allocation44]
        $region108: #{tpu_custom_call.1} parent=35 // pred_fallthru
          _
        %554 = shalt.err (0)
        %s556 = sshll.u32 %s548, 4
        %s557 = int_to_ptr.vmem [resolvable:$true] %s556
        %559 = dma.hbm_to_vmem [thread:$0]  %s547, 16, %s557, [#allocation3]
        %s560 = sadd.s32 %s240, 1
        %s561 = smul.u32 %s560, 128
        %s562 = sld [smem:[#allocation5 + %s561]]
        %p563 = scmp.gt.s32.totalorder %s562, 0
        %s564 = scalar_select %p563, %s562, 0
        %p565 = scmp.lt.s32.totalorder %s564, 63
        %s566 = scalar_select %p565, %s564, 63
        %s567 = smul.addr %s566, 16
        %s568 = scalar_lea.hbm %s1, %s567
        %s569 = scalar_lea.vmem [#allocation2], 16
        %s570 = scalar_lea.sflag [#allocation3], 1
        // Predicated region
        $region109: #{tpu_custom_call.1} parent=35 // pred_check
          _
        $region110: #{tpu_custom_call.1} parent=35 // pred_check_branch
          %572 = sbr.rel target = $region112
        $region111: #{tpu_custom_call.1} parent=35 // pred_region
          %573 = sst [smem:[#allocation14]] [#allocation47]
          %574 = sst [smem:[#allocation15]] [#allocation46]
        $region112: #{tpu_custom_call.1} parent=35 // pred_fallthru
          _
        %576 = shalt.err (0)
        %s578 = sshll.u32 %s569, 4
        %s579 = int_to_ptr.vmem [resolvable:$true] %s578
        %581 = dma.hbm_to_vmem [thread:$0]  %s568, 16, %s579, %s570
        %s582 = sadd.s32 %s561, 1
        %s583 = sld [smem:[#allocation5 + %s582]]
        %p584 = scmp.gt.s32.totalorder %s583, 0
        %s585 = scalar_select %p584, %s583, 0
        %p586 = scmp.lt.s32.totalorder %s585, 63
        %s587 = scalar_select %p586, %s585, 63
        %s588 = smul.addr %s587, 16
        %s589 = scalar_lea.hbm %s1, %s588
        %s590 = scalar_lea.vmem [#allocation2], 17
        // Predicated region
        $region113: #{tpu_custom_call.1} parent=35 // pred_check
          _
        $region114: #{tpu_custom_call.1} parent=35 // pred_check_branch
          %592 = sbr.rel target = $region116
        $region115: #{tpu_custom_call.1} parent=35 // pred_region
          %593 = sst [smem:[#allocation14]] [#allocation49]
          %594 = sst [smem:[#allocation15]] [#allocation48]
        $region116: #{tpu_custom_call.1} parent=35 // pred_fallthru
          _
        %596 = shalt.err (0)
        %s598 = sshll.u32 %s590, 4
        %s599 = int_to_ptr.vmem [resolvable:$true] %s598
        %601 = dma.hbm_to_vmem [thread:$0]  %s589, 16, %s599, %s570
        %s602 = sadd.s32 %s561, 2
        %s603 = sld [smem:[#allocation5 + %s602]]
        %p604 = scmp.gt.s32.totalorder %s603, 0
        %s605 = scalar_select %p604, %s603, 0
        %p606 = scmp.lt.s32.totalorder %s605, 63
        %s607 = scalar_select %p606, %s605, 63
        %s608 = smul.addr %s607, 16
        %s609 = scalar_lea.hbm %s1, %s608
        %s610 = scalar_lea.vmem [#allocation2], 18
        // Predicated region
        $region117: #{tpu_custom_call.1} parent=35 // pred_check
          _
        $region118: #{tpu_custom_call.1} parent=35 // pred_check_branch
          %612 = sbr.rel target = $region120
        $region119: #{tpu_custom_call.1} parent=35 // pred_region
          %613 = sst [smem:[#allocation14]] [#allocation51]
          %614 = sst [smem:[#allocation15]] [#allocation50]
        $region120: #{tpu_custom_call.1} parent=35 // pred_fallthru
          _
        %616 = shalt.err (0)
        %s618 = sshll.u32 %s610, 4
        %s619 = int_to_ptr.vmem [resolvable:$true] %s618
        %621 = dma.hbm_to_vmem [thread:$0]  %s609, 16, %s619, %s570
        %s622 = sadd.s32 %s561, 3
        %s623 = sld [smem:[#allocation5 + %s622]]
        %p624 = scmp.gt.s32.totalorder %s623, 0
        %s625 = scalar_select %p624, %s623, 0
        %p626 = scmp.lt.s32.totalorder %s625, 63
        %s627 = scalar_select %p626, %s625, 63
        %s628 = smul.addr %s627, 16
        %s629 = scalar_lea.hbm %s1, %s628
        %s630 = scalar_lea.vmem [#allocation2], 19
        // Predicated region
        $region121: #{tpu_custom_call.1} parent=35 // pred_check
          _
        $region122: #{tpu_custom_call.1} parent=35 // pred_check_branch
          %632 = sbr.rel target = $region124
        $region123: #{tpu_custom_call.1} parent=35 // pred_region
          %633 = sst [smem:[#allocation14]] [#allocation53]
          %634 = sst [smem:[#allocation15]] [#allocation52]
        $region124: #{tpu_custom_call.1} parent=35 // pred_fallthru
          _
        %636 = shalt.err (0)
        %s638 = sshll.u32 %s630, 4
        %s639 = int_to_ptr.vmem [resolvable:$true] %s638
        %641 = dma.hbm_to_vmem [thread:$0]  %s629, 16, %s639, %s570
        %s642 = sadd.s32 %s561, 4
        %s643 = sld [smem:[#allocation5 + %s642]]
        %p644 = scmp.gt.s32.totalorder %s643, 0
        %s645 = scalar_select %p644, %s643, 0
        %p646 = scmp.lt.s32.totalorder %s645, 63
        %s647 = scalar_select %p646, %s645, 63
        %s648 = smul.addr %s647, 16
        %s649 = scalar_lea.hbm %s1, %s648
        %s650 = scalar_lea.vmem [#allocation2], 20
        // Predicated region
        $region125: #{tpu_custom_call.1} parent=35 // pred_check
          _
        $region126: #{tpu_custom_call.1} parent=35 // pred_check_branch
          %652 = sbr.rel target = $region128
        $region127: #{tpu_custom_call.1} parent=35 // pred_region
          %653 = sst [smem:[#allocation14]] [#allocation55]
          %654 = sst [smem:[#allocation15]] [#allocation54]
        $region128: #{tpu_custom_call.1} parent=35 // pred_fallthru
          _
        %656 = shalt.err (0)
        %s658 = sshll.u32 %s650, 4
        %s659 = int_to_ptr.vmem [resolvable:$true] %s658
        %661 = dma.hbm_to_vmem [thread:$0]  %s649, 16, %s659, %s570
        %s662 = sadd.s32 %s561, 5
        %s663 = sld [smem:[#allocation5 + %s662]]
        %p664 = scmp.gt.s32.totalorder %s663, 0
        %s665 = scalar_select %p664, %s663, 0
        %p666 = scmp.lt.s32.totalorder %s665, 63
        %s667 = scalar_select %p666, %s665, 63
        %s668 = smul.addr %s667, 16
        %s669 = scalar_lea.hbm %s1, %s668
        %s670 = scalar_lea.vmem [#allocation2], 21
        // Predicated region
        $region129: #{tpu_custom_call.1} parent=35 // pred_check
          _
        $region130: #{tpu_custom_call.1} parent=35 // pred_check_branch
          %672 = sbr.rel target = $region132
        $region131: #{tpu_custom_call.1} parent=35 // pred_region
          %673 = sst [smem:[#allocation14]] [#allocation57]
          %674 = sst [smem:[#allocation15]] [#allocation56]
        $region132: #{tpu_custom_call.1} parent=35 // pred_fallthru
          _
        %676 = shalt.err (0)
        %s678 = sshll.u32 %s670, 4
        %s679 = int_to_ptr.vmem [resolvable:$true] %s678
        %681 = dma.hbm_to_vmem [thread:$0]  %s669, 16, %s679, %s570
        %s682 = sadd.s32 %s561, 6
        %s683 = sld [smem:[#allocation5 + %s682]]
        %p684 = scmp.gt.s32.totalorder %s683, 0
        %s685 = scalar_select %p684, %s683, 0
        %p686 = scmp.lt.s32.totalorder %s685, 63
        %s687 = scalar_select %p686, %s685, 63
        %s688 = smul.addr %s687, 16
        %s689 = scalar_lea.hbm %s1, %s688
        %s690 = scalar_lea.vmem [#allocation2], 22
        // Predicated region
        $region133: #{tpu_custom_call.1} parent=35 // pred_check
          _
        $region134: #{tpu_custom_call.1} parent=35 // pred_check_branch
          %692 = sbr.rel target = $region136
        $region135: #{tpu_custom_call.1} parent=35 // pred_region
          %693 = sst [smem:[#allocation14]] [#allocation59]
          %694 = sst [smem:[#allocation15]] [#allocation58]
        $region136: #{tpu_custom_call.1} parent=35 // pred_fallthru
          _
        %696 = shalt.err (0)
        %s698 = sshll.u32 %s690, 4
        %s699 = int_to_ptr.vmem [resolvable:$true] %s698
        %701 = dma.hbm_to_vmem [thread:$0]  %s689, 16, %s699, %s570
        %s702 = sadd.s32 %s561, 7
        %s703 = sld [smem:[#allocation5 + %s702]]
        %p704 = scmp.gt.s32.totalorder %s703, 0
        %s705 = scalar_select %p704, %s703, 0
        %p706 = scmp.lt.s32.totalorder %s705, 63
        %s707 = scalar_select %p706, %s705, 63
        %s708 = smul.addr %s707, 16
        %s709 = scalar_lea.hbm %s1, %s708
        %s710 = scalar_lea.vmem [#allocation2], 23
        // Predicated region
        $region137: #{tpu_custom_call.1} parent=35 // pred_check
          _
        $region138: #{tpu_custom_call.1} parent=35 // pred_check_branch
          %712 = sbr.rel target = $region140
        $region139: #{tpu_custom_call.1} parent=35 // pred_region
          %713 = sst [smem:[#allocation14]] [#allocation61]
          %714 = sst [smem:[#allocation15]] [#allocation60]
        $region140: #{tpu_custom_call.1} parent=35 // pred_fallthru
          _
        %716 = shalt.err (0)
        %s718 = sshll.u32 %s710, 4
        %s719 = int_to_ptr.vmem [resolvable:$true] %s718
        %721 = dma.hbm_to_vmem [thread:$0]  %s709, 16, %s719, %s570
        %s722 = sadd.s32 %s561, 8
        %s723 = sld [smem:[#allocation5 + %s722]]
        %p724 = scmp.gt.s32.totalorder %s723, 0
        %s725 = scalar_select %p724, %s723, 0
        %p726 = scmp.lt.s32.totalorder %s725, 63
        %s727 = scalar_select %p726, %s725, 63
        %s728 = smul.addr %s727, 16
        %s729 = scalar_lea.hbm %s1, %s728
        %s730 = scalar_lea.vmem [#allocation2], 24
        // Predicated region
        $region141: #{tpu_custom_call.1} parent=35 // pred_check
          _
        $region142: #{tpu_custom_call.1} parent=35 // pred_check_branch
          %732 = sbr.rel target = $region144
        $region143: #{tpu_custom_call.1} parent=35 // pred_region
          %733 = sst [smem:[#allocation14]] [#allocation63]
          %734 = sst [smem:[#allocation15]] [#allocation62]
        $region144: #{tpu_custom_call.1} parent=35 // pred_fallthru
          _
        %736 = shalt.err (0)
        %s738 = sshll.u32 %s730, 4
        %s739 = int_to_ptr.vmem [resolvable:$true] %s738
        %741 = dma.hbm_to_vmem [thread:$0]  %s729, 16, %s739, %s570
        %s742 = sadd.s32 %s561, 9
        %s743 = sld [smem:[#allocation5 + %s742]]
        %p744 = scmp.gt.s32.totalorder %s743, 0
        %s745 = scalar_select %p744, %s743, 0
        %p746 = scmp.lt.s32.totalorder %s745, 63
        %s747 = scalar_select %p746, %s745, 63
        %s748 = smul.addr %s747, 16
        %s749 = scalar_lea.hbm %s1, %s748
        %s750 = scalar_lea.vmem [#allocation2], 25
        // Predicated region
        $region145: #{tpu_custom_call.1} parent=35 // pred_check
          _
        $region146: #{tpu_custom_call.1} parent=35 // pred_check_branch
          %752 = sbr.rel target = $region148
        $region147: #{tpu_custom_call.1} parent=35 // pred_region
          %753 = sst [smem:[#allocation14]] [#allocation65]
          %754 = sst [smem:[#allocation15]] [#allocation64]
        $region148: #{tpu_custom_call.1} parent=35 // pred_fallthru
          _
        %756 = shalt.err (0)
        %s758 = sshll.u32 %s750, 4
        %s759 = int_to_ptr.vmem [resolvable:$true] %s758
        %761 = dma.hbm_to_vmem [thread:$0]  %s749, 16, %s759, %s570
        %s762 = sadd.s32 %s561, 10
        %s763 = sld [smem:[#allocation5 + %s762]]
        %p764 = scmp.gt.s32.totalorder %s763, 0
        %s765 = scalar_select %p764, %s763, 0
        %p766 = scmp.lt.s32.totalorder %s765, 63
        %s767 = scalar_select %p766, %s765, 63
        %s768 = smul.addr %s767, 16
        %s769 = scalar_lea.hbm %s1, %s768
        %s770 = scalar_lea.vmem [#allocation2], 26
        // Predicated region
        $region149: #{tpu_custom_call.1} parent=35 // pred_check
          _
        $region150: #{tpu_custom_call.1} parent=35 // pred_check_branch
          %772 = sbr.rel target = $region152
        $region151: #{tpu_custom_call.1} parent=35 // pred_region
          %773 = sst [smem:[#allocation14]] [#allocation67]
          %774 = sst [smem:[#allocation15]] [#allocation66]
        $region152: #{tpu_custom_call.1} parent=35 // pred_fallthru
          _
        %776 = shalt.err (0)
        %s778 = sshll.u32 %s770, 4
        %s779 = int_to_ptr.vmem [resolvable:$true] %s778
        %781 = dma.hbm_to_vmem [thread:$0]  %s769, 16, %s779, %s570
        %s782 = sadd.s32 %s561, 11
        %s783 = sld [smem:[#allocation5 + %s782]]
        %p784 = scmp.gt.s32.totalorder %s783, 0
        %s785 = scalar_select %p784, %s783, 0
        %p786 = scmp.lt.s32.totalorder %s785, 63
        %s787 = scalar_select %p786, %s785, 63
        %s788 = smul.addr %s787, 16
        %s789 = scalar_lea.hbm %s1, %s788
        %s790 = scalar_lea.vmem [#allocation2], 27
        // Predicated region
        $region153: #{tpu_custom_call.1} parent=35 // pred_check
          _
        $region154: #{tpu_custom_call.1} parent=35 // pred_check_branch
          %792 = sbr.rel target = $region156
        $region155: #{tpu_custom_call.1} parent=35 // pred_region
          %793 = sst [smem:[#allocation14]] [#allocation69]
          %794 = sst [smem:[#allocation15]] [#allocation68]
        $region156: #{tpu_custom_call.1} parent=35 // pred_fallthru
          _
        %796 = shalt.err (0)
        %s798 = sshll.u32 %s790, 4
        %s799 = int_to_ptr.vmem [resolvable:$true] %s798
        %801 = dma.hbm_to_vmem [thread:$0]  %s789, 16, %s799, %s570
        %s802 = sadd.s32 %s561, 12
        %s803 = sld [smem:[#allocation5 + %s802]]
        %p804 = scmp.gt.s32.totalorder %s803, 0
        %s805 = scalar_select %p804, %s803, 0
        %p806 = scmp.lt.s32.totalorder %s805, 63
        %s807 = scalar_select %p806, %s805, 63
        %s808 = smul.addr %s807, 16
        %s809 = scalar_lea.hbm %s1, %s808
        %s810 = scalar_lea.vmem [#allocation2], 28
        // Predicated region
        $region157: #{tpu_custom_call.1} parent=35 // pred_check
          _
        $region158: #{tpu_custom_call.1} parent=35 // pred_check_branch
          %812 = sbr.rel target = $region160
        $region159: #{tpu_custom_call.1} parent=35 // pred_region
          %813 = sst [smem:[#allocation14]] [#allocation71]
          %814 = sst [smem:[#allocation15]] [#allocation70]
        $region160: #{tpu_custom_call.1} parent=35 // pred_fallthru
          _
        %816 = shalt.err (0)
        %s818 = sshll.u32 %s810, 4
        %s819 = int_to_ptr.vmem [resolvable:$true] %s818
        %821 = dma.hbm_to_vmem [thread:$0]  %s809, 16, %s819, %s570
        %s822 = sadd.s32 %s561, 13
        %s823 = sld [smem:[#allocation5 + %s822]]
        %p824 = scmp.gt.s32.totalorder %s823, 0
        %s825 = scalar_select %p824, %s823, 0
        %p826 = scmp.lt.s32.totalorder %s825, 63
        %s827 = scalar_select %p826, %s825, 63
        %s828 = smul.addr %s827, 16
        %s829 = scalar_lea.hbm %s1, %s828
        %s830 = scalar_lea.vmem [#allocation2], 29
        // Predicated region
        $region161: #{tpu_custom_call.1} parent=35 // pred_check
          _
        $region162: #{tpu_custom_call.1} parent=35 // pred_check_branch
          %832 = sbr.rel target = $region164
        $region163: #{tpu_custom_call.1} parent=35 // pred_region
          %833 = sst [smem:[#allocation14]] [#allocation73]
          %834 = sst [smem:[#allocation15]] [#allocation72]
        $region164: #{tpu_custom_call.1} parent=35 // pred_fallthru
          _
        %836 = shalt.err (0)
        %s838 = sshll.u32 %s830, 4
        %s839 = int_to_ptr.vmem [resolvable:$true] %s838
        %841 = dma.hbm_to_vmem [thread:$0]  %s829, 16, %s839, %s570
        %s842 = sadd.s32 %s561, 14
        %s843 = sld [smem:[#allocation5 + %s842]]
        %p844 = scmp.gt.s32.totalorder %s843, 0
        %s845 = scalar_select %p844, %s843, 0
        %p846 = scmp.lt.s32.totalorder %s845, 63
        %s847 = scalar_select %p846, %s845, 63
        %s848 = smul.addr %s847, 16
        %s849 = scalar_lea.hbm %s1, %s848
        %s850 = scalar_lea.vmem [#allocation2], 30
        // Predicated region
        $region165: #{tpu_custom_call.1} parent=35 // pred_check
          _
        $region166: #{tpu_custom_call.1} parent=35 // pred_check_branch
          %852 = sbr.rel target = $region168
        $region167: #{tpu_custom_call.1} parent=35 // pred_region
          %853 = sst [smem:[#allocation14]] [#allocation75]
          %854 = sst [smem:[#allocation15]] [#allocation74]
        $region168: #{tpu_custom_call.1} parent=35 // pred_fallthru
          _
        %856 = shalt.err (0)
        %s858 = sshll.u32 %s850, 4
        %s859 = int_to_ptr.vmem [resolvable:$true] %s858
        %861 = dma.hbm_to_vmem [thread:$0]  %s849, 16, %s859, %s570
        %s862 = sadd.s32 %s561, 15
        %s863 = sld [smem:[#allocation5 + %s862]]
        %p864 = scmp.gt.s32.totalorder %s863, 0
        %s865 = scalar_select %p864, %s863, 0
        %p866 = scmp.lt.s32.totalorder %s865, 63
        %s867 = scalar_select %p866, %s865, 63
        %s868 = smul.addr %s867, 16
        %s869 = scalar_lea.hbm %s1, %s868
        %s870 = scalar_lea.vmem [#allocation2], 31
        // Predicated region
        $region169: #{tpu_custom_call.1} parent=35 // pred_check
          _
        $region170: #{tpu_custom_call.1} parent=35 // pred_check_branch
          %872 = sbr.rel target = $region172
        $region171: #{tpu_custom_call.1} parent=35 // pred_region
          %873 = sst [smem:[#allocation14]] [#allocation77]
          %874 = sst [smem:[#allocation15]] [#allocation76]
        $region172: #{tpu_custom_call.1} parent=35 // pred_fallthru
          _
        %876 = shalt.err (0)
        %s878 = sshll.u32 %s870, 4
        %s879 = int_to_ptr.vmem [resolvable:$true] %s878
        %881 = dma.hbm_to_vmem [thread:$0]  %s869, 16, %s879, %s570
        %v882 = vlaneseq
        %v883 = vshrl.u32 %v882, 7
        %s884 = smul.u32 16, 1
        %s885 = sshll.u32 %s884, 4
        %886 = dma.done [#allocation3], %s885
        %v887 = vld [vmem:[#allocation2] sm:$0xff]
        %v888 = vld [vmem:[#allocation2 + $0x8] sm:$0xff]
        %v889 = vld [vmem:[#allocation9] sm:$0xff]
        %v890 = vld [vmem:[#allocation9 + $0x8] sm:$0xff]
        %v891 = vadd.f32 %v887, %v889
        %v892 = vadd.f32 %v888, %v890
        %893 = vadd.xlane.f32.xlu0 %v891
        %v894 = vpop.xlane.xlu0 %893
        %895 = vadd.xlane.f32.xlu0 %v892
        %v896 = vpop.xlane.xlu0 %895
        %v897 = vmul.f32 %v894, 0.0078125
        %v898 = vmul.f32 %v896, 0.0078125
        %v899 = vmul.f32 %v891, %v891
        %v900 = vmul.f32 %v892, %v892
        %901 = vadd.xlane.f32.xlu0 %v899
        %v902 = vpop.xlane.xlu0 %901
        %903 = vadd.xlane.f32.xlu0 %v900
        %v904 = vpop.xlane.xlu0 %903
        %v905 = vmul.f32 %v902, 0.0078125
        %v906 = vmul.f32 %v904, 0.0078125
        %v907 = vmul.f32 %v897, %v897
        %v908 = vmul.f32 %v898, %v898
        %v909 = vsub.f32 %v905, %v907
        %v910 = vsub.f32 %v906, %v908
        %v911 = vmax.f32 %v909, 0.0
        %v912 = vmax.f32 %v910, 0.0
        %v913 = vsub.f32 %v891, %v897
        %v914 = vsub.f32 %v892, %v898
        %v915 = vadd.f32 %v911, 1e-12
        %v916 = vadd.f32 %v912, 1e-12
        %v917 = vrsqrt.pop %v915
        %v918 = vrsqrt.pop %v916
        %v919 = vmul.f32 %v913, %v917
        %v920 = vmul.f32 %v914, %v918
        %v921 = vld [vmem:[%s4] sm:$0x1]
        %v923 = vlaneseq
        %v924 = vshrl.u32 %v923, 7
        %v925 = vsub.s32 0, %v924
        %v926 = vrot.slane %v921, %v925
        %v928 = vmul.f32 %v919, %v926
        %v929 = vmul.f32 %v920, %v926
        %v930 = vld [vmem:[%s5] sm:$0x1]
        %v932 = vlaneseq
        %v933 = vshrl.u32 %v932, 7
        %v934 = vsub.s32 0, %v933
        %v935 = vrot.slane %v930, %v934
        %v937 = vadd.f32 %v928, %v935
        %v938 = vadd.f32 %v929, %v935
        %v939 = vld [vmem:[%s208] sm:$0x1]
        %v940 = vlaneseq
        %v941 = vshrl.u32 %v940, 7
        %v942 = vsub.s32 0, %v941
        %v943 = vrot.slane %v939, %v942
        %vm944 = vcmp.eq.s32.totalorder %v943, %v883
        %v945 = vsel %vm944, 1, 0
        %v946 = vcvt.s32.f32 %v945
        %v947 = vpack.c.bf16 %v946, %v946
        %vm948 = vcmask 130048
        %v949 = vsel %vm948, %v946, 0.0
        %950 = vadd.xlane.f32.xlu0 %v949
        %v951 = vpop.xlane.xlu0 %950
        %v952 = vpack.c.bf16 %v938, %v937
        %v954 = vsel %vm948, %v947, 0
        %956 = vmatprep.subr.bf16.mxu0 0
        %957 = vmatpush1.bf16.msra.mxu0 0
        %958 = vmatprep.subr.bf16.mxu0 0
        %959 = vmatpush1.bf16.msra.mxu0 0
        %960 = vmatprep.subr.bf16.mxu0 0
        %961 = vmatpush1.bf16.msra.mxu0 0
        %962 = vmatprep.subr.bf16.mxu0 0
        %963 = vmatpush1.bf16.msra.mxu0 0
        %964 = vmatprep.subr.bf16.mxu0 0
        %965 = vmatpush1.bf16.msra.mxu0 0
        %966 = vmatprep.subr.bf16.mxu0 0
        %967 = vmatpush1.bf16.msra.mxu0 0
        %968 = vmatprep.subr.bf16.mxu0 0
        %969 = vmatpush1.bf16.msra.mxu0 0
        %970 = vmatprep.subr.bf16.mxu0 0
        %971 = vmatpush1.bf16.msra.mxu0 %v952
        %972 = vmatprep.subr.bf16.mxu0 0
        %973 = vmatpush2.bf16.msra.mxu0 0
        %974 = vmatprep.subr.bf16.mxu0 0
        %975 = vmatpush2.bf16.msra.mxu0 0
        %976 = vmatprep.subr.bf16.mxu0 0
        %977 = vmatpush2.bf16.msra.mxu0 0
        %978 = vmatprep.subr.bf16.mxu0 0
        %979 = vmatpush2.bf16.msra.mxu0 0
        %980 = vmatprep.subr.bf16.mxu0 0
        %981 = vmatpush2.bf16.msra.mxu0 0
        %982 = vmatprep.subr.bf16.mxu0 0
        %983 = vmatpush2.bf16.msra.mxu0 0
        %984 = vmatprep.subr.bf16.mxu0 0
        %985 = vmatpush2.bf16.msra.mxu0 0
        %986 = vmatprep.subr.bf16.mxu0 0
        %987 = vmatpush2.bf16.msra.mxu0 0
        %988 = vmatprep.mubr.bf16.mxu0 0
        %989 = vmatmul.mubr.bf16.gmra.mxu0 %v954
        %v990 = vpop.f32.mrf.mxu0
        %v991 = vadd.f32 0.0, %v990
        %v992 = vpop.f32.mrf.mxu0
        %v993 = vpop.f32.mrf.mxu0
        %v994 = vpop.f32.mrf.mxu0
        %995 = vdwg.mxu0
        %v996 = vmax.f32 %v951, 1.0
        %v997 = vrcp.pop %v996
        %v998 = vmul.f32 %v991, %v997
        %999 = vst [vmem:[%s236] sm:$0xff] %v998
        %s1000 = sshll.u32 %s884, 4
        %1001 = dma.done %s570, %s1000
        %v1002 = vld [vmem:[#allocation2 + $0x10] sm:$0xff]
        %v1003 = vld [vmem:[#allocation2 + $0x18] sm:$0xff]
        %v1004 = vld [vmem:[#allocation9] sm:$0xff]
        %v1005 = vld [vmem:[#allocation9 + $0x8] sm:$0xff]
        %v1006 = vadd.f32 %v1002, %v1004
        %v1007 = vadd.f32 %v1003, %v1005
        %1008 = vadd.xlane.f32.xlu0 %v1006
        %v1009 = vpop.xlane.xlu0 %1008
        %1010 = vadd.xlane.f32.xlu0 %v1007
        %v1011 = vpop.xlane.xlu0 %1010
        %v1012 = vmul.f32 %v1009, 0.0078125
        %v1013 = vmul.f32 %v1011, 0.0078125
        %v1014 = vmul.f32 %v1006, %v1006
        %v1015 = vmul.f32 %v1007, %v1007
        %1016 = vadd.xlane.f32.xlu0 %v1014
        %v1017 = vpop.xlane.xlu0 %1016
        %1018 = vadd.xlane.f32.xlu0 %v1015
        %v1019 = vpop.xlane.xlu0 %1018
        %v1020 = vmul.f32 %v1017, 0.0078125
        %v1021 = vmul.f32 %v1019, 0.0078125
        %v1022 = vmul.f32 %v1012, %v1012
        %v1023 = vmul.f32 %v1013, %v1013
        %v1024 = vsub.f32 %v1020, %v1022
        %v1025 = vsub.f32 %v1021, %v1023
        %v1026 = vmax.f32 %v1024, 0.0
        %v1027 = vmax.f32 %v1025, 0.0
        %v1028 = vsub.f32 %v1006, %v1012
        %v1029 = vsub.f32 %v1007, %v1013
        %v1030 = vadd.f32 %v1026, 1e-12
        %v1031 = vadd.f32 %v1027, 1e-12
        %v1032 = vrsqrt.pop %v1030
        %v1033 = vrsqrt.pop %v1031
        %v1034 = vmul.f32 %v1028, %v1032
        %v1035 = vmul.f32 %v1029, %v1033
        %v1036 = vld [vmem:[%s4] sm:$0x1]
        %v1038 = vlaneseq
        %v1039 = vshrl.u32 %v1038, 7
        %v1040 = vsub.s32 0, %v1039
        %v1041 = vrot.slane %v1036, %v1040
        %v1043 = vmul.f32 %v1034, %v1041
        %v1044 = vmul.f32 %v1035, %v1041
        %v1045 = vld [vmem:[%s5] sm:$0x1]
        %v1047 = vlaneseq
        %v1048 = vshrl.u32 %v1047, 7
        %v1049 = vsub.s32 0, %v1048
        %v1050 = vrot.slane %v1045, %v1049
        %v1052 = vadd.f32 %v1043, %v1050
        %v1053 = vadd.f32 %v1044, %v1050
        %s1054 = scalar_lea.vmem %s208, 1 [#allocation6]
        %v1055 = vld [vmem:[%s1054] sm:$0x1]
        %v1056 = vlaneseq
        %v1057 = vshrl.u32 %v1056, 7
        %v1058 = vsub.s32 0, %v1057
        %v1059 = vrot.slane %v1055, %v1058
        %vm1060 = vcmp.eq.s32.totalorder %v1059, %v883
        %v1061 = vsel %vm1060, 1, 0
        %v1062 = vcvt.s32.f32 %v1061
        %v1063 = vpack.c.bf16 %v1062, %v1062
        %v1064 = vsel %vm948, %v1062, 0.0
        %1065 = vadd.xlane.f32.xlu0 %v1064
        %v1066 = vpop.xlane.xlu0 %1065
        %v1067 = vpack.c.bf16 %v1053, %v1052
        %v1069 = vsel %vm948, %v1063, 0
        %1071 = vmatprep.subr.bf16.mxu0 0
        %1072 = vmatpush1.bf16.msra.mxu0 0
        %1073 = vmatprep.subr.bf16.mxu0 0
        %1074 = vmatpush1.bf16.msra.mxu0 0
        %1075 = vmatprep.subr.bf16.mxu0 0
        %1076 = vmatpush1.bf16.msra.mxu0 0
        %1077 = vmatprep.subr.bf16.mxu0 0
        %1078 = vmatpush1.bf16.msra.mxu0 0
        %1079 = vmatprep.subr.bf16.mxu0 0
        %1080 = vmatpush1.bf16.msra.mxu0 0
        %1081 = vmatprep.subr.bf16.mxu0 0
        %1082 = vmatpush1.bf16.msra.mxu0 0
        %1083 = vmatprep.subr.bf16.mxu0 0
        %1084 = vmatpush1.bf16.msra.mxu0 0
        %1085 = vmatprep.subr.bf16.mxu0 0
        %1086 = vmatpush1.bf16.msra.mxu0 %v1067
        %1087 = vmatprep.subr.bf16.mxu0 0
        %1088 = vmatpush2.bf16.msra.mxu0 0
        %1089 = vmatprep.subr.bf16.mxu0 0
        %1090 = vmatpush2.bf16.msra.mxu0 0
        %1091 = vmatprep.subr.bf16.mxu0 0
        %1092 = vmatpush2.bf16.msra.mxu0 0
        %1093 = vmatprep.subr.bf16.mxu0 0
        %1094 = vmatpush2.bf16.msra.mxu0 0
        %1095 = vmatprep.subr.bf16.mxu0 0
        %1096 = vmatpush2.bf16.msra.mxu0 0
        %1097 = vmatprep.subr.bf16.mxu0 0
        %1098 = vmatpush2.bf16.msra.mxu0 0
        %1099 = vmatprep.subr.bf16.mxu0 0
        %1100 = vmatpush2.bf16.msra.mxu0 0
        %1101 = vmatprep.subr.bf16.mxu0 0
        %1102 = vmatpush2.bf16.msra.mxu0 0
        %1103 = vmatprep.mubr.bf16.mxu0 0
        %1104 = vmatmul.mubr.bf16.gmra.mxu0 %v1069
        %v1105 = vpop.f32.mrf.mxu0
        %v1106 = vadd.f32 0.0, %v1105
        %v1107 = vpop.f32.mrf.mxu0
        %v1108 = vpop.f32.mrf.mxu0
        %v1109 = vpop.f32.mrf.mxu0
        %1110 = vdwg.mxu0
        %v1111 = vmax.f32 %v1066, 1.0
        %v1112 = vrcp.pop %v1111
        %v1113 = vmul.f32 %v1106, %v1112
        %s1114 = scalar_lea.vmem %s236, 8 [#allocation11]
        %1115 = vst [vmem:[%s1114] sm:$0xff] %v1113
        %s1116 = sand.u32 %s125, 1
        %s1117 = scalar_lea.sflag [#allocation8], %s1116
        %s1118 = sand.u32 %s125, 1
        %s1119 = smul.addr %s1118, 16
        %s1120 = scalar_lea.vmem [#allocation11], %s1119
        // Predicated region
        $region173: #{tpu_custom_call.1} parent=35 // pred_check
          %p1121 = pneg %p135
        $region174: #{tpu_custom_call.1} parent=35 // pred_check_branch
          %1123 = sbr.rel (%p1121) target = $region176
        $region175: #{tpu_custom_call.1} parent=35 // pred_region
          %s1124 = smul.u32 2, %s28
          %s1126 = ssub.s32 256, 256
          %1127 = vsyncadd %s1117, %s1126
          %s1128 = smul.addr %s1124, 128
          %s1129 = scalar_lea.hbm %s6, %s1128
          %s1130 = sshll.u32 %s1120, 4
          %s1131 = int_to_ptr.vmem [resolvable:$true] %s1130
          %1136 = dma.vmem_to_hbm [thread:$0]  %s1131, 256, %s1129, %s1117, 128, 128, 8
        $region176: #{tpu_custom_call.1} parent=35 // pred_fallthru
          _
      $region36: #{tpu_custom_call.1} parent=5 // pred_fallthru
        _
      %p1137 = scmp.le.s32.totalorder 2, %s23
      // Predicated region
      $region177: #{tpu_custom_call.1} parent=5 // pred_check
        %p1138 = pneg %p1137
      $region178: #{tpu_custom_call.1} parent=5 // pred_check_branch
        %1140 = sbr.rel (%p1138) target = $region180
      $region179: #{tpu_custom_call.1} parent=5 // pred_region
        %s1141 = ssub.s32 %s23, 2
        // Predicated region
        $region181: #{tpu_custom_call.1} parent=179 // pred_check
          %p1142 = pneg %p141
        $region182: #{tpu_custom_call.1} parent=179 // pred_check_branch
          %1144 = sbr.rel (%p1142) target = $region184
        $region183: #{tpu_custom_call.1} parent=179 // pred_region
          %s1145 = sand.u32 %s126, 1
          %s1146 = scalar_lea.sflag [#allocation8], %s1145
          %s1147 = sand.u32 %s126, 1
          %s1148 = smul.addr %s1147, 16
          %s1149 = scalar_lea.vmem [#allocation11], %s1148
          %1150 = dma.done %s1146, 256
        $region184: #{tpu_custom_call.1} parent=179 // pred_fallthru
          _
      $region180: #{tpu_custom_call.1} parent=5 // pred_fallthru
        _
    $region6: #{tpu_custom_call.1} parent=1 // loop_footer
      %s27 = sadd.s32 1, %s23
    $region7: #{tpu_custom_call.1} parent=1 // loop_footer_branch
      %22 = sbr.rel target = $region3
    $region8: #{tpu_custom_call.1} parent=1 // loop_exit
      _
    %1151 = vsyncpa [#allocation7], 1
    %s1152 = scalar_lea.sflag [#allocation7], 1
    %1153 = vsyncpa %s1152, 1
    %1154 = vsyncpa [#allocation10], 1
    %1155 = vsyncpa [#allocation8], 1
    %s1156 = scalar_lea.sflag [#allocation8], 1
    %1157 = vsyncpa %s1156, 1
  %1158 = vsyncmov [#allocation3]
  %s1159 = vpop.sfrf %1158
  %p1160 = scmp.eq.s32.totalorder %s1159, 0
  %p1161 = pneg %p1160
  %1163 = shalt.err (%p1161)
  %s1164 = scalar_lea.sflag [#allocation3], 1
  %1165 = vsyncmov %s1164
  %s1166 = vpop.sfrf %1165
  %p1167 = scmp.eq.s32.totalorder %s1166, 0
  %p1168 = pneg %p1167
  %1170 = shalt.err (%p1168)

</llo_original>
